<compile_context>
chip_gen: v6e
topology: v6e:2x2x1
jax: 0.10.0
libtpu: 0.0.40
codegen_flags: <defaults>
</compile_context>

<pallas_src>
import numpy as np

import jax
import jax.numpy as jnp
from jax.experimental import pallas as pl
from jax.experimental.pallas import tpu as pltpu

LEAKY_SLOPE = 0.01   # PyTorch nn.LeakyReLU default negative_slope
_NEG_BIG = -1e30     # additive mask value for padded softmax positions


def _round_up(x, m):
    return ((x + m - 1) // m) * m


# Slot indices in the packed weight / bias slabs.
W_SC1, W_E1, W_L1, W_SC2, W_SEG2, W_E2, W_L2, W_SC3, W_E3, W_L3, W_PR = range(11)
B_L1, B_SC2, B_L2, B_SC3, B_L3, B_PR = range(6)
N_W, N_B = 11, 8


# ----------------------------- fused Pallas kernel --------------------------

def _fused_forward_kernel(x_ref, m1_ref, w_ref, b_ref, o_ref):
    """x_ref: (tb, N_pad, P)  m1_ref: (1, N_pad, P)  w_ref: (11, P, P)
    b_ref: (8, P)  o_ref: (tb, P).  P is a multiple of 128 (lane-dense)."""
    f32 = jnp.float32
    tb, n_pad, P = x_ref.shape

    def W(k):
        return w_ref[k]                 # (P, P), static slot index

    def B(k):
        return b_ref[k:k + 1, :]        # (1, P)

    def leaky(h):
        return jnp.where(h >= 0.0, h, LEAKY_SLOPE * h)

    # ---- level 1: attention over series, all (sensor,device) groups at once ----
    x = x_ref[...]                                             # (tb, N, P)
    x2 = x.reshape(tb * n_pad, P)
    sc = jnp.dot(x2, W(W_SC1), preferred_element_type=f32)     # block-diag scorer
    sc = sc.reshape(tb, n_pad, P) + m1_ref[...]                # + bias / -1e30 pad mask
    m = jnp.max(sc, axis=1, keepdims=True)                     # exact per-group max
    e = jnp.exp(sc - m)
    den = jnp.sum(e, axis=1, keepdims=True)
    alpha = e * pl.reciprocal(den, approx=True)                # (tb, N, P) lanes = groups
    a_rep = jnp.dot(alpha.reshape(tb * n_pad, P), W(W_E1),     # broadcast alpha over F
                    preferred_element_type=f32).reshape(tb, n_pad, P)
    pooled = jnp.sum(a_rep * x, axis=1)                        # (tb, P)
    h1 = leaky(jnp.dot(pooled, W(W_L1), preferred_element_type=f32) + B(B_L1))

    # ---- level 2: attention over devices, per sensor (segment softmax on lanes) -
    sc2 = jnp.dot(h1, W(W_SC2), preferred_element_type=f32) + B(B_SC2)   # (tb, P)
    m2 = jnp.max(sc2, axis=-1, keepdims=True)      # row max; shift-invariant per group
    e2 = jnp.exp(sc2 - m2)
    den2 = jnp.dot(e2, W(W_SEG2), preferred_element_type=f32)  # per-sensor sum, broadcast
    den2 = jnp.maximum(den2, 1e-30)
    alpha2 = e2 * pl.reciprocal(den2, approx=True)
    a2_rep = jnp.dot(alpha2, W(W_E2), preferred_element_type=f32)
    h2 = leaky(jnp.dot(a2_rep * h1, W(W_L2), preferred_element_type=f32) + B(B_L2))

    # ---- level 3: attention over sensors ----------------------------------------
    sc3 = jnp.dot(h2, W(W_SC3), preferred_element_type=f32) + B(B_SC3)   # pad -> -1e30
    m3 = jnp.max(sc3, axis=-1, keepdims=True)
    e3 = jnp.exp(sc3 - m3)
    den3 = jnp.sum(e3, axis=-1, keepdims=True)
    alpha3 = e3 * pl.reciprocal(den3, approx=True)
    a3_rep = jnp.dot(alpha3, W(W_E3), preferred_element_type=f32)
    h3 = leaky(jnp.dot(a3_rep * h2, W(W_L3), preferred_element_type=f32) + B(B_L3))

    # ---- predictor (lane-dense padded output) -----------------------------------
    logits = jnp.dot(h3, W(W_PR), preferred_element_type=f32) + B(B_PR)
    o_ref[...] = logits.astype(o_ref.dtype)


def fused_att_forward(x, mask1, wstack, bstack, *, tb):
    """Single pallas_call for the whole hierarchy.  x: (B_pad, N_pad, P)."""
    B_pad, N_pad, P = x.shape
    grid = (B_pad // tb,)
    return pl.pallas_call(
        _fused_forward_kernel,
        out_shape=jax.ShapeDtypeStruct((B_pad, P), jnp.float32),
        grid=grid,
        in_specs=[
            pl.BlockSpec((tb, N_pad, P), lambda i: (i, 0, 0)),
            pl.BlockSpec((1, N_pad, P), lambda i: (0, 0, 0)),
            pl.BlockSpec((N_W, P, P), lambda i: (0, 0, 0)),
            pl.BlockSpec((N_B, P), lambda i: (0, 0)),
        ],
        out_specs=pl.BlockSpec((tb, P), lambda i: (i, 0)),
        compiler_params=pltpu.CompilerParams(
            dimension_semantics=("parallel",),          # megacore / v7x 2-TC
            vmem_limit_bytes=32 * 1024 * 1024,          # safe on v5e/v6e/v7x
        ),
    )(x, mask1, wstack, bstack)


# ------------------------------- model wrapper -------------------------------

class ATTModelPallas:
    SERIES_OUT = 32
    DEVICE_OUT = 32
    SENSOR_OUT = 32

    def __init__(self, class_num, sensor_dim, num_in_sensors, devices, key):
        assert all(v >= 1 for v in num_in_sensors.values()), "empty series group"
        self.sensors = list(sensor_dim.keys())
        self.devices = list(devices)
        self.sensor_feat = dict(sensor_dim)
        self.sensor_series = dict(num_in_sensors)
        self.class_num = class_num
        S = self.n_sensor = len(self.sensors)
        Dn = self.n_dev = len(self.devices)
        G = self.G = S * Dn
        SO, DO, XO = self.SERIES_OUT, self.DEVICE_OUT, self.SENSOR_OUT

        self.F_pad = max(sensor_dim.values())
        self.N_pad = _round_up(max(num_in_sensors.values()), 8)
        # one uniform, 128-multiple lane width for all packed weights/activations
        P = self.P = _round_up(
            max(G * self.F_pad, G, G * SO, S * DO, XO, S, class_num), 128)

        def normal(k, shape, scale):
            return np.asarray(jax.random.normal(k, shape, jnp.float32)) * scale

        wpack = np.zeros((N_W, P, P), np.float32)
        bpack = np.zeros((N_B, P), np.float32)
        m1 = np.zeros((1, self.N_pad, P), np.float32)

        # -------- level 1: per-(sensor, device) series attention ----------
        for s_idx, sensor in enumerate(self.sensors):
            f = sensor_dim[sensor]
            n = num_in_sensors[sensor]
            for d_idx in range(Dn):
                g = s_idx * Dn + d_idx
                key, k1, k2, k3 = jax.random.split(key, 4)
                saw = normal(k1, (f,), 0.1)                       # scorer weight
                sab = 0.0                                         # scorer bias
                slw = normal(k2, (f, SO), 1.0 / np.sqrt(f))       # projection
                slb = normal(k3, (SO,), 0.01)
                wpack[W_SC1, g * self.F_pad: g * self.F_pad + f, g] = saw
                wpack[W_E1, g, g * self.F_pad: (g + 1) * self.F_pad] = 1.0
                wpack[W_L1, g * self.F_pad: g * self.F_pad + f,
                      g * SO: (g + 1) * SO] = slw
                bpack[B_L1, g * SO: (g + 1) * SO] = slb
                m1[0, :n, g] = sab                 # valid series rows: +bias
                m1[0, n:, g] = _NEG_BIG            # padded series rows: masked out

        # -------- level 2: per-sensor attention over devices ----------
        for s_idx in range(S):
            key, k1, k2, k3 = jax.random.split(key, 4)
            daw = normal(k1, (SO,), 0.1)
            dab = 0.0
            dlw = normal(k2, (SO, DO), 1.0 / np.sqrt(SO))
            dlb = normal(k3, (DO,), 0.01)
            for d_idx in range(Dn):
                g = s_idx * Dn + d_idx
                wpack[W_SC2, g * SO: (g + 1) * SO, g] = daw
                bpack[B_SC2, g] = dab
                wpack[W_E2, g, g * SO: (g + 1) * SO] = 1.0
                # device-sum + block-diag projection folded into one matrix
                wpack[W_L2, g * SO: (g + 1) * SO,
                      s_idx * DO: (s_idx + 1) * DO] = dlw
                for d2 in range(Dn):
                    wpack[W_SEG2, g, s_idx * Dn + d2] = 1.0   # same-sensor segment sum
            bpack[B_L2, s_idx * DO: (s_idx + 1) * DO] = dlb
        for g in range(G, P):
            wpack[W_SEG2, g, g] = 1.0     # keep padded-lane denominators nonzero

        # -------- level 3: attention over sensors ----------
        key, k1, k2, k3 = jax.random.split(key, 4)
        gaw = normal(k1, (DO,), 0.1)
        gab = 0.0
        glw = normal(k2, (DO, XO), 1.0 / np.sqrt(DO))
        glb = normal(k3, (XO,), 0.01)
        for s_idx in range(S):
            wpack[W_SC3, s_idx * DO: (s_idx + 1) * DO, s_idx] = gaw
            wpack[W_E3, s_idx, s_idx * DO: (s_idx + 1) * DO] = 1.0
            wpack[W_L3, s_idx * DO: (s_idx + 1) * DO, :XO] = glw   # sensor-sum folded
            bpack[B_SC3, s_idx] = gab
        bpack[B_SC3, S:] = _NEG_BIG       # padded sensor lanes masked out of softmax
        bpack[B_L3, :XO] = glb

        # -------- predictor (merge_module), lane-padded output ----------
        key, k1, k2 = jax.random.split(key, 3)
        wpack[W_PR, :XO, :class_num] = normal(k1, (XO, class_num), 1.0 / np.sqrt(XO))
        bpack[B_PR, :class_num] = normal(k2, (class_num,), 0.01)

        self.Wstack = jnp.asarray(wpack)
        self.Bstack = jnp.asarray(bpack)
        self.mask1 = jnp.asarray(m1)

    def forward(self, inputs):
        """inputs: nested list [sensor][device] -> (B, N_series, F_sensor)."""
        B = inputs[0][0].shape[0]
        G, P, F_pad, N_pad = self.G, self.P, self.F_pad, self.N_pad

        # Pack all (sensor,device) series tensors into one lane-dense slab
        # (B, N_pad, P).  TODO(synk): pre-pack/cache this slab at data-loading
        # time to avoid the extra HBM pass from pad+concat on every call.
        xs = []
        for s_idx, sensor in enumerate(self.sensors):
            f = self.sensor_feat[sensor]
            n = self.sensor_series[sensor]
            for d_idx in range(self.n_dev):
                xi = inputs[s_idx][d_idx].astype(jnp.float32)
                xi = jnp.pad(xi, ((0, 0), (0, N_pad - n), (0, F_pad - f)))
                xs.append(xi)
        x = jnp.concatenate(xs, axis=-1)                         # (B, N_pad, G*F_pad)
        if G * F_pad < P:
            x = jnp.pad(x, ((0, 0), (0, 0), (0, P - G * F_pad)))

        # Batch tile: multiple of 8; >=2 grid steps when possible (v7x 2 TCs),
        # capped at 512 so double-buffered blocks + temps fit 32 MiB VMEM.
        b8 = _round_up(B, 8)
        if b8 >= 16:
            tb = min(512, _round_up((b8 + 1) // 2, 8))
        else:
            tb = b8
        B_pad = _round_up(B, tb)
        if B_pad != B:
            x = jnp.pad(x, ((0, B_pad - B), (0, 0), (0, 0)))

        out = fused_att_forward(x, self.mask1, self.Wstack, self.Bstack, tb=tb)
        return out[:B, :self.class_num]                          # (B, class_num)

    # TODO(synk): record_on/record_off/get_record attention-weight bookkeeping
    # (pure Python-side logging in the PyTorch module) is not reproduced here.


# ---------------------------------- main -------------------------------------

if __name__ == "__main__":
    key = jax.random.PRNGKey(0)

    class_num = 4
    sensor_dim = {"acc": 16, "gyro": 16}       # feature dim per sensor
    num_in_sensors = {"acc": 8, "gyro": 8}     # number of series per (sensor, device)
    devices = ["phone", "watch"]
    batch = 2

    key, mkey = jax.random.split(key)
    model = ATTModelPallas(class_num, sensor_dim, num_in_sensors, devices, mkey)

    # Build nested-list input: [sensor][device] -> (B, N_series, F_sensor)
    inputs = []
    for sensor in sensor_dim:
        per_dev = []
        for _dev in devices:
            key, sub = jax.random.split(key)
            per_dev.append(jax.random.normal(
                sub, (batch, num_in_sensors[sensor], sensor_dim[sensor]), jnp.float32))
        inputs.append(per_dev)

    out = model.forward(inputs)
    out = jax.block_until_ready(out)
    assert out.shape == (batch, class_num), out.shape
    assert bool(jnp.all(jnp.isfinite(out)))
    print("KERNEL_OK")
</pallas_src>

<mosaic_0001>
module attributes {stable_mosaic.version = 11 : i64} {
  func.func @_fused_forward_kernel(%arg0: i32, %arg1: memref<8x8x128xf32, #tpu.memory_space<vmem>>, %arg2: memref<1x8x128xf32, #tpu.memory_space<vmem>>, %arg3: memref<11x128x128xf32, #tpu.memory_space<vmem>>, %arg4: memref<8x128xf32, #tpu.memory_space<vmem>>, %arg5: memref<8x128xf32, #tpu.memory_space<vmem>>) attributes {dimension_semantics = [#tpu.dimension_semantics<parallel>], iteration_bounds = array<i64: 1>, scalar_prefetch = 0 : i64, scratch_operands = 0 : i64, tpu.core_type = #tpu.core_type<tc>, window_params = [{transform_indices = @transform_0, window_bounds = array<i64: 8, 8, 128>}, {pipeline_mode = #tpu.pipeline_mode<synchronous>, transform_indices = @transform_1, window_bounds = array<i64: 1, 8, 128>}, {pipeline_mode = #tpu.pipeline_mode<synchronous>, transform_indices = @transform_2, window_bounds = array<i64: 11, 128, 128>}, {pipeline_mode = #tpu.pipeline_mode<synchronous>, transform_indices = @transform_3, window_bounds = array<i64: 8, 128>}, {transform_indices = @transform_4, window_bounds = array<i64: 8, 128>}]} {
    %c0 = arith.constant 0 : index
    %c0_0 = arith.constant 0 : index
    %c0_1 = arith.constant 0 : index
    %0 = vector.load %arg1[%c0, %c0_0, %c0_1] : memref<8x8x128xf32, #tpu.memory_space<vmem>>, vector<8x8x128xf32>
    %1 = vector.shape_cast %0 : vector<8x8x128xf32> to vector<64x128xf32>
    %c0_2 = arith.constant 0 : index
    %c0_3 = arith.constant 0 : index
    %c0_4 = arith.constant 0 : index
    %2 = vector.load %arg3[%c0_2, %c0_3, %c0_4] : memref<11x128x128xf32, #tpu.memory_space<vmem>>, vector<1x128x128xf32>
    %3 = vector.shape_cast %2 : vector<1x128x128xf32> to vector<128x128xf32>
    %cst = arith.constant dense<0.000000e+00> : vector<64x128xf32>
    %4 = tpu.matmul %1, %3, %cst {dimension_numbers = #tpu.dot_dimension_numbers<[1], [0], [0], [1], [0, 0, 1, 1], [], []>} : vector<64x128xf32>, vector<128x128xf32>, vector<64x128xf32> -> vector<64x128xf32>
    %5 = vector.shape_cast %4 : vector<64x128xf32> to vector<8x8x128xf32>
    %c0_5 = arith.constant 0 : index
    %c0_6 = arith.constant 0 : index
    %c0_7 = arith.constant 0 : index
    %6 = vector.load %arg2[%c0_5, %c0_6, %c0_7] : memref<1x8x128xf32, #tpu.memory_space<vmem>>, vector<1x8x128xf32>
    %7 = vector.broadcast %6 : vector<1x8x128xf32> to vector<8x8x128xf32>
    %8 = arith.addf %5, %7 : vector<8x8x128xf32>
    %cst_8 = arith.constant dense<0xFF800000> : vector<8x128xf32>
    %9 = vector.multi_reduction <maximumf>, %8, %cst_8 [1] : vector<8x8x128xf32> to vector<8x128xf32>
    %10 = vector.shape_cast %9 : vector<8x128xf32> to vector<8x1x128xf32>
    %11 = vector.broadcast %10 : vector<8x1x128xf32> to vector<8x8x128xf32>
    %12 = arith.subf %8, %11 : vector<8x8x128xf32>
    %13 = math.exp %12 : vector<8x8x128xf32>
    %cst_9 = arith.constant dense<0.000000e+00> : vector<8x128xf32>
    %14 = vector.multi_reduction <add>, %13, %cst_9 [1] : vector<8x8x128xf32> to vector<8x128xf32>
    %15 = vector.shape_cast %14 : vector<8x128xf32> to vector<8x1x128xf32>
    %16 = tpu.reciprocal %15 {approx = true} : vector<8x1x128xf32> -> vector<8x1x128xf32>
    %17 = vector.broadcast %16 : vector<8x1x128xf32> to vector<8x8x128xf32>
    %18 = arith.mulf %13, %17 : vector<8x8x128xf32>
    %19 = vector.shape_cast %18 : vector<8x8x128xf32> to vector<64x128xf32>
    %c1 = arith.constant 1 : index
    %c0_10 = arith.constant 0 : index
    %c0_11 = arith.constant 0 : index
    %20 = vector.load %arg3[%c1, %c0_10, %c0_11] : memref<11x128x128xf32, #tpu.memory_space<vmem>>, vector<1x128x128xf32>
    %21 = vector.shape_cast %20 : vector<1x128x128xf32> to vector<128x128xf32>
    %cst_12 = arith.constant dense<0.000000e+00> : vector<64x128xf32>
    %22 = tpu.matmul %19, %21, %cst_12 {dimension_numbers = #tpu.dot_dimension_numbers<[1], [0], [0], [1], [0, 0, 1, 1], [], []>} : vector<64x128xf32>, vector<128x128xf32>, vector<64x128xf32> -> vector<64x128xf32>
    %23 = vector.shape_cast %22 : vector<64x128xf32> to vector<8x8x128xf32>
    %24 = arith.mulf %23, %0 : vector<8x8x128xf32>
    %cst_13 = arith.constant dense<0.000000e+00> : vector<8x128xf32>
    %25 = vector.multi_reduction <add>, %24, %cst_13 [1] : vector<8x8x128xf32> to vector<8x128xf32>
    %c2 = arith.constant 2 : index
    %c0_14 = arith.constant 0 : index
    %c0_15 = arith.constant 0 : index
    %26 = vector.load %arg3[%c2, %c0_14, %c0_15] : memref<11x128x128xf32, #tpu.memory_space<vmem>>, vector<1x128x128xf32>
    %27 = vector.shape_cast %26 : vector<1x128x128xf32> to vector<128x128xf32>
    %cst_16 = arith.constant dense<0.000000e+00> : vector<8x128xf32>
    %28 = tpu.matmul %25, %27, %cst_16 {dimension_numbers = #tpu.dot_dimension_numbers<[1], [0], [0], [1], [0, 0, 1, 1], [], []>} : vector<8x128xf32>, vector<128x128xf32>, vector<8x128xf32> -> vector<8x128xf32>
    %c0_17 = arith.constant 0 : index
    %c0_18 = arith.constant 0 : index
    %29 = vector.load %arg4[%c0_17, %c0_18] : memref<8x128xf32, #tpu.memory_space<vmem>>, vector<1x128xf32>
    %30 = vector.broadcast %29 : vector<1x128xf32> to vector<8x128xf32>
    %31 = arith.addf %28, %30 : vector<8x128xf32>
    %cst_19 = arith.constant 0.000000e+00 : f32
    %32 = vector.broadcast %cst_19 : f32 to vector<8x128xf32>
    %33 = arith.cmpf oge, %31, %32 : vector<8x128xf32>
    %cst_20 = arith.constant 0.00999999977 : f32
    %34 = vector.broadcast %cst_20 : f32 to vector<8x128xf32>
    %35 = arith.mulf %34, %31 : vector<8x128xf32>
    %36 = arith.select %33, %31, %35 : vector<8x128xi1>, vector<8x128xf32>
    %c3 = arith.constant 3 : index
    %c0_21 = arith.constant 0 : index
    %c0_22 = arith.constant 0 : index
    %37 = vector.load %arg3[%c3, %c0_21, %c0_22] : memref<11x128x128xf32, #tpu.memory_space<vmem>>, vector<1x128x128xf32>
    %38 = vector.shape_cast %37 : vector<1x128x128xf32> to vector<128x128xf32>
    %cst_23 = arith.constant dense<0.000000e+00> : vector<8x128xf32>
    %39 = tpu.matmul %36, %38, %cst_23 {dimension_numbers = #tpu.dot_dimension_numbers<[1], [0], [0], [1], [0, 0, 1, 1], [], []>} : vector<8x128xf32>, vector<128x128xf32>, vector<8x128xf32> -> vector<8x128xf32>
    %c1_24 = arith.constant 1 : index
    %c0_25 = arith.constant 0 : index
    %40 = vector.load %arg4[%c1_24, %c0_25] : memref<8x128xf32, #tpu.memory_space<vmem>>, vector<1x128xf32>
    %41 = vector.broadcast %40 : vector<1x128xf32> to vector<8x128xf32>
    %42 = arith.addf %39, %41 : vector<8x128xf32>
    %cst_26 = arith.constant dense<0xFF800000> : vector<8xf32>
    %43 = vector.multi_reduction <maximumf>, %42, %cst_26 [1] : vector<8x128xf32> to vector<8xf32>
    %44 = vector.shape_cast %43 : vector<8xf32> to vector<8x1xf32>
    %45 = vector.broadcast %44 : vector<8x1xf32> to vector<8x128xf32>
    %46 = arith.subf %42, %45 : vector<8x128xf32>
    %47 = math.exp %46 : vector<8x128xf32>
    %c4 = arith.constant 4 : index
    %c0_27 = arith.constant 0 : index
    %c0_28 = arith.constant 0 : index
    %48 = vector.load %arg3[%c4, %c0_27, %c0_28] : memref<11x128x128xf32, #tpu.memory_space<vmem>>, vector<1x128x128xf32>
    %49 = vector.shape_cast %48 : vector<1x128x128xf32> to vector<128x128xf32>
    %cst_29 = arith.constant dense<0.000000e+00> : vector<8x128xf32>
    %50 = tpu.matmul %47, %49, %cst_29 {dimension_numbers = #tpu.dot_dimension_numbers<[1], [0], [0], [1], [0, 0, 1, 1], [], []>} : vector<8x128xf32>, vector<128x128xf32>, vector<8x128xf32> -> vector<8x128xf32>
    %cst_30 = arith.constant 1.000000e-30 : f32
    %51 = vector.broadcast %cst_30 : f32 to vector<8x128xf32>
    %52 = arith.maximumf %50, %51 : vector<8x128xf32>
    %53 = tpu.reciprocal %52 {approx = true} : vector<8x128xf32> -> vector<8x128xf32>
    %54 = arith.mulf %47, %53 : vector<8x128xf32>
    %c5 = arith.constant 5 : index
    %c0_31 = arith.constant 0 : index
    %c0_32 = arith.constant 0 : index
    %55 = vector.load %arg3[%c5, %c0_31, %c0_32] : memref<11x128x128xf32, #tpu.memory_space<vmem>>, vector<1x128x128xf32>
    %56 = vector.shape_cast %55 : vector<1x128x128xf32> to vector<128x128xf32>
    %cst_33 = arith.constant dense<0.000000e+00> : vector<8x128xf32>
    %57 = tpu.matmul %54, %56, %cst_33 {dimension_numbers = #tpu.dot_dimension_numbers<[1], [0], [0], [1], [0, 0, 1, 1], [], []>} : vector<8x128xf32>, vector<128x128xf32>, vector<8x128xf32> -> vector<8x128xf32>
    %58 = arith.mulf %57, %36 : vector<8x128xf32>
    %c6 = arith.constant 6 : index
    %c0_34 = arith.constant 0 : index
    %c0_35 = arith.constant 0 : index
    %59 = vector.load %arg3[%c6, %c0_34, %c0_35] : memref<11x128x128xf32, #tpu.memory_space<vmem>>, vector<1x128x128xf32>
    %60 = vector.shape_cast %59 : vector<1x128x128xf32> to vector<128x128xf32>
    %cst_36 = arith.constant dense<0.000000e+00> : vector<8x128xf32>
    %61 = tpu.matmul %58, %60, %cst_36 {dimension_numbers = #tpu.dot_dimension_numbers<[1], [0], [0], [1], [0, 0, 1, 1], [], []>} : vector<8x128xf32>, vector<128x128xf32>, vector<8x128xf32> -> vector<8x128xf32>
    %c2_37 = arith.constant 2 : index
    %c0_38 = arith.constant 0 : index
    %62 = vector.load %arg4[%c2_37, %c0_38] : memref<8x128xf32, #tpu.memory_space<vmem>>, vector<1x128xf32>
    %63 = vector.broadcast %62 : vector<1x128xf32> to vector<8x128xf32>
    %64 = arith.addf %61, %63 : vector<8x128xf32>
    %cst_39 = arith.constant 0.000000e+00 : f32
    %65 = vector.broadcast %cst_39 : f32 to vector<8x128xf32>
    %66 = arith.cmpf oge, %64, %65 : vector<8x128xf32>
    %cst_40 = arith.constant 0.00999999977 : f32
    %67 = vector.broadcast %cst_40 : f32 to vector<8x128xf32>
    %68 = arith.mulf %67, %64 : vector<8x128xf32>
    %69 = arith.select %66, %64, %68 : vector<8x128xi1>, vector<8x128xf32>
    %c7 = arith.constant 7 : index
    %c0_41 = arith.constant 0 : index
    %c0_42 = arith.constant 0 : index
    %70 = vector.load %arg3[%c7, %c0_41, %c0_42] : memref<11x128x128xf32, #tpu.memory_space<vmem>>, vector<1x128x128xf32>
    %71 = vector.shape_cast %70 : vector<1x128x128xf32> to vector<128x128xf32>
    %cst_43 = arith.constant dense<0.000000e+00> : vector<8x128xf32>
    %72 = tpu.matmul %69, %71, %cst_43 {dimension_numbers = #tpu.dot_dimension_numbers<[1], [0], [0], [1], [0, 0, 1, 1], [], []>} : vector<8x128xf32>, vector<128x128xf32>, vector<8x128xf32> -> vector<8x128xf32>
    %c3_44 = arith.constant 3 : index
    %c0_45 = arith.constant 0 : index
    %73 = vector.load %arg4[%c3_44, %c0_45] : memref<8x128xf32, #tpu.memory_space<vmem>>, vector<1x128xf32>
    %74 = vector.broadcast %73 : vector<1x128xf32> to vector<8x128xf32>
    %75 = arith.addf %72, %74 : vector<8x128xf32>
    %cst_46 = arith.constant dense<0xFF800000> : vector<8xf32>
    %76 = vector.multi_reduction <maximumf>, %75, %cst_46 [1] : vector<8x128xf32> to vector<8xf32>
    %77 = vector.shape_cast %76 : vector<8xf32> to vector<8x1xf32>
    %78 = vector.broadcast %77 : vector<8x1xf32> to vector<8x128xf32>
    %79 = arith.subf %75, %78 : vector<8x128xf32>
    %80 = math.exp %79 : vector<8x128xf32>
    %cst_47 = arith.constant dense<0.000000e+00> : vector<8xf32>
    %81 = vector.multi_reduction <add>, %80, %cst_47 [1] : vector<8x128xf32> to vector<8xf32>
    %82 = vector.shape_cast %81 : vector<8xf32> to vector<8x1xf32>
    %83 = tpu.reciprocal %82 {approx = true} : vector<8x1xf32> -> vector<8x1xf32>
    %84 = vector.broadcast %83 : vector<8x1xf32> to vector<8x128xf32>
    %85 = arith.mulf %80, %84 : vector<8x128xf32>
    %c8 = arith.constant 8 : index
    %c0_48 = arith.constant 0 : index
    %c0_49 = arith.constant 0 : index
    %86 = vector.load %arg3[%c8, %c0_48, %c0_49] : memref<11x128x128xf32, #tpu.memory_space<vmem>>, vector<1x128x128xf32>
    %87 = vector.shape_cast %86 : vector<1x128x128xf32> to vector<128x128xf32>
    %cst_50 = arith.constant dense<0.000000e+00> : vector<8x128xf32>
    %88 = tpu.matmul %85, %87, %cst_50 {dimension_numbers = #tpu.dot_dimension_numbers<[1], [0], [0], [1], [0, 0, 1, 1], [], []>} : vector<8x128xf32>, vector<128x128xf32>, vector<8x128xf32> -> vector<8x128xf32>
    %89 = arith.mulf %88, %69 : vector<8x128xf32>
    %c9 = arith.constant 9 : index
    %c0_51 = arith.constant 0 : index
    %c0_52 = arith.constant 0 : index
    %90 = vector.load %arg3[%c9, %c0_51, %c0_52] : memref<11x128x128xf32, #tpu.memory_space<vmem>>, vector<1x128x128xf32>
    %91 = vector.shape_cast %90 : vector<1x128x128xf32> to vector<128x128xf32>
    %cst_53 = arith.constant dense<0.000000e+00> : vector<8x128xf32>
    %92 = tpu.matmul %89, %91, %cst_53 {dimension_numbers = #tpu.dot_dimension_numbers<[1], [0], [0], [1], [0, 0, 1, 1], [], []>} : vector<8x128xf32>, vector<128x128xf32>, vector<8x128xf32> -> vector<8x128xf32>
    %c4_54 = arith.constant 4 : index
    %c0_55 = arith.constant 0 : index
    %93 = vector.load %arg4[%c4_54, %c0_55] : memref<8x128xf32, #tpu.memory_space<vmem>>, vector<1x128xf32>
    %94 = vector.broadcast %93 : vector<1x128xf32> to vector<8x128xf32>
    %95 = arith.addf %92, %94 : vector<8x128xf32>
    %cst_56 = arith.constant 0.000000e+00 : f32
    %96 = vector.broadcast %cst_56 : f32 to vector<8x128xf32>
    %97 = arith.cmpf oge, %95, %96 : vector<8x128xf32>
    %cst_57 = arith.constant 0.00999999977 : f32
    %98 = vector.broadcast %cst_57 : f32 to vector<8x128xf32>
    %99 = arith.mulf %98, %95 : vector<8x128xf32>
    %100 = arith.select %97, %95, %99 : vector<8x128xi1>, vector<8x128xf32>
    %c10 = arith.constant 10 : index
    %c0_58 = arith.constant 0 : index
    %c0_59 = arith.constant 0 : index
    %101 = vector.load %arg3[%c10, %c0_58, %c0_59] : memref<11x128x128xf32, #tpu.memory_space<vmem>>, vector<1x128x128xf32>
    %102 = vector.shape_cast %101 : vector<1x128x128xf32> to vector<128x128xf32>
    %cst_60 = arith.constant dense<0.000000e+00> : vector<8x128xf32>
    %103 = tpu.matmul %100, %102, %cst_60 {dimension_numbers = #tpu.dot_dimension_numbers<[1], [0], [0], [1], [0, 0, 1, 1], [], []>} : vector<8x128xf32>, vector<128x128xf32>, vector<8x128xf32> -> vector<8x128xf32>
    %c5_61 = arith.constant 5 : index
    %c0_62 = arith.constant 0 : index
    %104 = vector.load %arg4[%c5_61, %c0_62] : memref<8x128xf32, #tpu.memory_space<vmem>>, vector<1x128xf32>
    %105 = vector.broadcast %104 : vector<1x128xf32> to vector<8x128xf32>
    %106 = arith.addf %103, %105 : vector<8x128xf32>
    %c0_63 = arith.constant 0 : index
    %c0_64 = arith.constant 0 : index
    %107 = vector.load %arg5[%c0_63, %c0_64] : memref<8x128xf32, #tpu.memory_space<vmem>>, vector<8x128xf32>
    tpu.vector_store %arg5[%c0_63, %c0_64], %106 {strides = array<i32>} : memref<8x128xf32, #tpu.memory_space<vmem>>, vector<8x128xf32>,
    return
  }
  func.func @transform_0(%arg0: i32) -> (i32, i32, i32) {
    %c0_i32 = arith.constant 0 : i32
    %c0_i32_0 = arith.constant 0 : i32
    %c0_i32_1 = arith.constant 0 : i32
    return %arg0, %c0_i32, %c0_i32_0 : i32, i32, i32
  }
  func.func @transform_1(%arg0: i32) -> (i32, i32, i32) {
    %c0_i32 = arith.constant 0 : i32
    %c0_i32_0 = arith.constant 0 : i32
    %c0_i32_1 = arith.constant 0 : i32
    %c0_i32_2 = arith.constant 0 : i32
    return %c0_i32, %c0_i32_0, %c0_i32_1 : i32, i32, i32
  }
  func.func @transform_2(%arg0: i32) -> (i32, i32, i32) {
    %c0_i32 = arith.constant 0 : i32
    %c0_i32_0 = arith.constant 0 : i32
    %c0_i32_1 = arith.constant 0 : i32
    %c0_i32_2 = arith.constant 0 : i32
    return %c0_i32, %c0_i32_0, %c0_i32_1 : i32, i32, i32
  }
  func.func @transform_3(%arg0: i32) -> (i32, i32) {
    %c0_i32 = arith.constant 0 : i32
    %c0_i32_0 = arith.constant 0 : i32
    %c0_i32_1 = arith.constant 0 : i32
    return %c0_i32, %c0_i32_0 : i32, i32
  }
  func.func @transform_4(%arg0: i32) -> (i32, i32) {
    %c0_i32 = arith.constant 0 : i32
    %c0_i32_0 = arith.constant 0 : i32
    return %arg0, %c0_i32 : i32, i32
  }
}

</mosaic_0001>

<llo_original>
// kernel: tpu_custom_call.1
$region0: #{tpu_custom_call.1}
  #allocation0 [shape = 'u32[]', space=smem, size = 0x4, offset = 0x4, fixed_abs, tag = 'smem constant byte address 0x4 - core index']
  #allocation1 [shape = 'u32[144,128]{1,0:T(1,128)}', space=vmem, size = 0x12000, scoped, tag = 'internal scratch']
  %s0 = inlined_call_operand.hbm [shape: f32[8,8,128], index: 0, kind: input, shape index: {}]
  %s1 = inlined_call_operand.hbm [shape: f32[1,8,128], index: 1, kind: input, shape index: {}]
  %s2 = inlined_call_operand.hbm [shape: f32[11,128,128], index: 2, kind: input, shape index: {}]
  %s3 = inlined_call_operand.hbm [shape: f32[8,128], index: 3, kind: input, shape index: {}]
  %s4 = inlined_call_operand.hbm [shape: f32[8,128], index: 4, kind: output, shape index: {}]
  %s5 = sld [smem:[#allocation0]]
  $region42: #{tpu_custom_call.1} parent=0
    _
  %s7 = ssub.s32 1, %s5
  %s8 = scalar_select 0, %s7, %s5
  $region1: #{tpu_custom_call.1} parent=0
    #allocation2 [shape = 'u8[32768]{0}', space=vmem, size = 0x8000, scoped, tag = 'input window, operand 0, single buffered']
    #allocation3 [shape = 's32[1]{0}', space=sflag, size = 0x4, scoped, tag = 'scoped memory for tpu_custom_call.1']
    #allocation4 [shape = 's32[1]{0}', space=sflag, size = 0x4, scoped, tag = 'scoped memory for tpu_custom_call.1']
    #allocation5 [shape = 'u8[4096]{0}', space=vmem, size = 0x1000, scoped, tag = 'input window, operand 1, single buffered']
    #allocation6 [shape = 's32[1]{0}', space=sflag, size = 0x4, scoped, tag = 'scoped memory for tpu_custom_call.1']
    #allocation7 [shape = 'u8[720896]{0}', space=vmem, size = 0xb0000, scoped, tag = 'input window, operand 2, single buffered']
    #allocation8 [shape = 'u8[4096]{0}', space=vmem, size = 0x1000, scoped, tag = 'input window, operand 3, single buffered']
    #allocation9 [shape = 's32[1]{0}', space=sflag, size = 0x4, scoped, tag = 'scoped memory for tpu_custom_call.1']
    #allocation10 [shape = 'u8[4096]{0}', space=vmem, size = 0x1000, scoped, tag = 'output window, operand 0, single buffered']
    %9 = vsyncpa [#allocation3], 0
    %10 = vsyncpa [#allocation6], 0
    %11 = vsyncpa [#allocation9], 0
    %12 = vsyncpa [#allocation4], 0
    // Predicated region
    $region2: #{tpu_custom_call.1} parent=1 // pred_check
      _
    $region3: #{tpu_custom_call.1} parent=1 // pred_check_branch
      %14 = sbr.rel (0) target = $region5
    $region4: #{tpu_custom_call.1} parent=1 // pred_region
      %s16 = ssub.s32 1024, 1024
      %17 = vsyncadd [#allocation3], %s16
      %s18 = sshll.u32 [#allocation2], 4
      %s19 = int_to_ptr.vmem [resolvable:$true] %s18
      %24 = dma.hbm_to_vmem [thread:$0]  %s0, 1024, %s19, [#allocation3], 128, 128, 8
    $region5: #{tpu_custom_call.1} parent=1 // pred_fallthru
      _
    // Predicated region
    $region6: #{tpu_custom_call.1} parent=1 // pred_check
      _
    $region7: #{tpu_custom_call.1} parent=1 // pred_check_branch
      %26 = sbr.rel (0) target = $region9
    $region8: #{tpu_custom_call.1} parent=1 // pred_region
      %s28 = ssub.s32 128, 128
      %29 = vsyncadd [#allocation6], %s28
      %s31 = sshll.u32 [#allocation5], 4
      %s32 = int_to_ptr.vmem [resolvable:$true] %s31
      %34 = dma.hbm_to_vmem [thread:$0]  %s1, 128, %s32, [#allocation6]
    $region9: #{tpu_custom_call.1} parent=1 // pred_fallthru
      _
    // Predicated region
    $region10: #{tpu_custom_call.1} parent=1 // pred_check
      _
    $region11: #{tpu_custom_call.1} parent=1 // pred_check_branch
      %36 = sbr.rel (0) target = $region13
    $region12: #{tpu_custom_call.1} parent=1 // pred_region
      %s38 = ssub.s32 22528, 22528
      %39 = vsyncadd [#allocation6], %s38
      %s40 = sshll.u32 [#allocation7], 4
      %s41 = int_to_ptr.vmem [resolvable:$true] %s40
      %46 = dma.hbm_to_vmem [thread:$0]  %s2, 22528, %s41, [#allocation6], 128, 128, 8
    $region13: #{tpu_custom_call.1} parent=1 // pred_fallthru
      _
    // Predicated region
    $region14: #{tpu_custom_call.1} parent=1 // pred_check
      _
    $region15: #{tpu_custom_call.1} parent=1 // pred_check_branch
      %48 = sbr.rel (0) target = $region17
    $region16: #{tpu_custom_call.1} parent=1 // pred_region
      %s50 = ssub.s32 128, 128
      %51 = vsyncadd [#allocation9], %s50
      %s53 = sshll.u32 [#allocation8], 4
      %s54 = int_to_ptr.vmem [resolvable:$true] %s53
      %56 = dma.hbm_to_vmem [thread:$0]  %s3, 128, %s54, [#allocation9]
    $region17: #{tpu_custom_call.1} parent=1 // pred_fallthru
      _
    // Predicated region
    $region18: #{tpu_custom_call.1} parent=1 // pred_check
      _
    $region19: #{tpu_custom_call.1} parent=1 // pred_check_branch
      %58 = sbr.rel (0) target = $region21
    $region20: #{tpu_custom_call.1} parent=1 // pred_region
      %59 = dma.done [#allocation3], 1024
    $region21: #{tpu_custom_call.1} parent=1 // pred_fallthru
      _
    // Predicated region
    $region22: #{tpu_custom_call.1} parent=1 // pred_check
      _
    $region23: #{tpu_custom_call.1} parent=1 // pred_check_branch
      %61 = sbr.rel (0) target = $region25
    $region24: #{tpu_custom_call.1} parent=1 // pred_region
      %62 = dma.done [#allocation6], 128
    $region25: #{tpu_custom_call.1} parent=1 // pred_fallthru
      _
    // Predicated region
    $region26: #{tpu_custom_call.1} parent=1 // pred_check
      _
    $region27: #{tpu_custom_call.1} parent=1 // pred_check_branch
      %64 = sbr.rel (0) target = $region29
    $region28: #{tpu_custom_call.1} parent=1 // pred_region
      %65 = dma.done [#allocation6], 22528
    $region29: #{tpu_custom_call.1} parent=1 // pred_fallthru
      _
    // Predicated region
    $region30: #{tpu_custom_call.1} parent=1 // pred_check
      _
    $region31: #{tpu_custom_call.1} parent=1 // pred_check_branch
      %67 = sbr.rel (0) target = $region33
    $region32: #{tpu_custom_call.1} parent=1 // pred_region
      %68 = dma.done [#allocation9], 128
    $region33: #{tpu_custom_call.1} parent=1 // pred_fallthru
      _
    %v69 = vld [vmem:[#allocation2] sm:$0xff]
    %v70 = vld [vmem:[#allocation2 + $0x8] sm:$0xff]
    %v71 = vld [vmem:[#allocation2 + $0x10] sm:$0xff]
    %v72 = vld [vmem:[#allocation2 + $0x18] sm:$0xff]
    %v73 = vld [vmem:[#allocation2 + $0x20] sm:$0xff]
    %v74 = vld [vmem:[#allocation2 + $0x28] sm:$0xff]
    %v75 = vld [vmem:[#allocation2 + $0x30] sm:$0xff]
    %v76 = vld [vmem:[#allocation2 + $0x38] sm:$0xff]
    %v77 = vld [vmem:[#allocation7] sm:$0xff]
    %v78 = vld [vmem:[#allocation7 + $0x8] sm:$0xff]
    %v79 = vld [vmem:[#allocation7 + $0x10] sm:$0xff]
    %v80 = vld [vmem:[#allocation7 + $0x18] sm:$0xff]
    %v81 = vld [vmem:[#allocation7 + $0x20] sm:$0xff]
    %v82 = vld [vmem:[#allocation7 + $0x28] sm:$0xff]
    %v83 = vld [vmem:[#allocation7 + $0x30] sm:$0xff]
    %v84 = vld [vmem:[#allocation7 + $0x38] sm:$0xff]
    %v85 = vld [vmem:[#allocation7 + $0x40] sm:$0xff]
    %v86 = vld [vmem:[#allocation7 + $0x48] sm:$0xff]
    %v87 = vld [vmem:[#allocation7 + $0x50] sm:$0xff]
    %v88 = vld [vmem:[#allocation7 + $0x58] sm:$0xff]
    %v89 = vld [vmem:[#allocation7 + $0x60] sm:$0xff]
    %v90 = vld [vmem:[#allocation7 + $0x68] sm:$0xff]
    %v91 = vld [vmem:[#allocation7 + $0x70] sm:$0xff]
    %v92 = vld [vmem:[#allocation7 + $0x78] sm:$0xff]
    %93 = vmatprep.subr.mxu0 0.0
    %94 = vmatpush1.msra.mxu0 %v92
    %95 = vmatprep.subr.mxu0 0.0
    %96 = vmatpush1.msra.mxu0 %v91
    %97 = vmatprep.subr.mxu0 0.0
    %98 = vmatpush1.msra.mxu0 %v90
    %99 = vmatprep.subr.mxu0 0.0
    %100 = vmatpush1.msra.mxu0 %v89
    %101 = vmatprep.subr.mxu0 0.0
    %102 = vmatpush1.msra.mxu0 %v88
    %103 = vmatprep.subr.mxu0 0.0
    %104 = vmatpush1.msra.mxu0 %v87
    %105 = vmatprep.subr.mxu0 0.0
    %106 = vmatpush1.msra.mxu0 %v86
    %107 = vmatprep.subr.mxu0 0.0
    %108 = vmatpush1.msra.mxu0 %v85
    %109 = vmatprep.subr.mxu0 0.0
    %110 = vmatpush1.msra.mxu0 %v84
    %111 = vmatprep.subr.mxu0 0.0
    %112 = vmatpush1.msra.mxu0 %v83
    %113 = vmatprep.subr.mxu0 0.0
    %114 = vmatpush1.msra.mxu0 %v82
    %115 = vmatprep.subr.mxu0 0.0
    %116 = vmatpush1.msra.mxu0 %v81
    %117 = vmatprep.subr.mxu0 0.0
    %118 = vmatpush1.msra.mxu0 %v80
    %119 = vmatprep.subr.mxu0 0.0
    %120 = vmatpush1.msra.mxu0 %v79
    %121 = vmatprep.subr.mxu0 0.0
    %122 = vmatpush1.msra.mxu0 %v78
    %123 = vmatprep.subr.mxu0 0.0
    %124 = vmatpush1.msra.mxu0 %v77
    %125 = vmatprep.subr.mxu0 0.0
    %126 = vmatpush2.msra.mxu0 0.0
    %127 = vmatprep.subr.mxu0 0.0
    %128 = vmatpush2.msra.mxu0 0.0
    %129 = vmatprep.subr.mxu0 0.0
    %130 = vmatpush2.msra.mxu0 0.0
    %131 = vmatprep.subr.mxu0 0.0
    %132 = vmatpush2.msra.mxu0 0.0
    %133 = vmatprep.subr.mxu0 0.0
    %134 = vmatpush2.msra.mxu0 0.0
    %135 = vmatprep.subr.mxu0 0.0
    %136 = vmatpush2.msra.mxu0 0.0
    %137 = vmatprep.subr.mxu0 0.0
    %138 = vmatpush2.msra.mxu0 0.0
    %139 = vmatprep.subr.mxu0 0.0
    %140 = vmatpush2.msra.mxu0 0.0
    %141 = vmatprep.subr.mxu0 0.0
    %142 = vmatpush2.msra.mxu0 0.0
    %143 = vmatprep.subr.mxu0 0.0
    %144 = vmatpush2.msra.mxu0 0.0
    %145 = vmatprep.subr.mxu0 0.0
    %146 = vmatpush2.msra.mxu0 0.0
    %147 = vmatprep.subr.mxu0 0.0
    %148 = vmatpush2.msra.mxu0 0.0
    %149 = vmatprep.subr.mxu0 0.0
    %150 = vmatpush2.msra.mxu0 0.0
    %151 = vmatprep.subr.mxu0 0.0
    %152 = vmatpush2.msra.mxu0 0.0
    %153 = vmatprep.subr.mxu0 0.0
    %154 = vmatpush2.msra.mxu0 0.0
    %155 = vmatprep.subr.mxu0 0.0
    %156 = vmatpush2.msra.mxu0 0.0
    %157 = vmatprep.mubr.f32.mxu0 0.0
    %158 = vmatmul.mubr.f32.gmra.mxu0 %v69
    %v159 = vpop.f32.mrf.mxu0
    %v160 = vadd.f32 0.0, %v159
    %v161 = vpop.f32.mrf.mxu0
    %162 = vmatprep.mubr.f32.mxu0 0.0
    %163 = vmatmul.mubr.f32.gmra.mxu0 %v70
    %v164 = vpop.f32.mrf.mxu0
    %v165 = vadd.f32 0.0, %v164
    %v166 = vpop.f32.mrf.mxu0
    %167 = vmatprep.mubr.f32.mxu0 0.0
    %168 = vmatmul.mubr.f32.gmra.mxu0 %v71
    %v169 = vpop.f32.mrf.mxu0
    %v170 = vadd.f32 0.0, %v169
    %v171 = vpop.f32.mrf.mxu0
    %172 = vmatprep.mubr.f32.mxu0 0.0
    %173 = vmatmul.mubr.f32.gmra.mxu0 %v72
    %v174 = vpop.f32.mrf.mxu0
    %v175 = vadd.f32 0.0, %v174
    %v176 = vpop.f32.mrf.mxu0
    %177 = vmatprep.mubr.f32.mxu0 0.0
    %178 = vmatmul.mubr.f32.gmra.mxu0 %v73
    %v179 = vpop.f32.mrf.mxu0
    %v180 = vadd.f32 0.0, %v179
    %v181 = vpop.f32.mrf.mxu0
    %182 = vmatprep.mubr.f32.mxu0 0.0
    %183 = vmatmul.mubr.f32.gmra.mxu0 %v74
    %v184 = vpop.f32.mrf.mxu0
    %v185 = vadd.f32 0.0, %v184
    %v186 = vpop.f32.mrf.mxu0
    %187 = vmatprep.mubr.f32.mxu0 0.0
    %188 = vmatmul.mubr.f32.gmra.mxu0 %v75
    %v189 = vpop.f32.mrf.mxu0
    %v190 = vadd.f32 0.0, %v189
    %v191 = vpop.f32.mrf.mxu0
    %192 = vmatprep.mubr.f32.mxu0 0.0
    %193 = vmatmul.mubr.f32.gmra.mxu0 %v76
    %v194 = vpop.f32.mrf.mxu0
    %v195 = vadd.f32 0.0, %v194
    %v196 = vpop.f32.mrf.mxu0
    %197 = vdwg.mxu0
    %v198 = vld [vmem:[#allocation5] sm:$0xff]
    %v199 = vadd.f32 %v160, %v198
    %v200 = vadd.f32 %v165, %v198
    %v201 = vadd.f32 %v170, %v198
    %v202 = vadd.f32 %v175, %v198
    %v203 = vadd.f32 %v180, %v198
    %v204 = vadd.f32 %v185, %v198
    %v205 = vadd.f32 %v190, %v198
    %v206 = vadd.f32 %v195, %v198
    %v207 = vrot.slane %v199, 4
    %v208 = vmax.f32 %v199, %v207
    %v209 = vrot.slane %v208, 2
    %v210 = vmax.f32 %v208, %v209
    %v211 = vrot.slane %v210, 1
    %v212 = vmax.f32 %v210, %v211
    %v213 = vrot.slane %v200, 4
    %v214 = vmax.f32 %v200, %v213
    %v215 = vrot.slane %v214, 2
    %v216 = vmax.f32 %v214, %v215
    %v217 = vrot.slane %v216, 1
    %v218 = vmax.f32 %v216, %v217
    %v219 = vrot.slane %v201, 4
    %v220 = vmax.f32 %v201, %v219
    %v221 = vrot.slane %v220, 2
    %v222 = vmax.f32 %v220, %v221
    %v223 = vrot.slane %v222, 1
    %v224 = vmax.f32 %v222, %v223
    %v225 = vrot.slane %v202, 4
    %v226 = vmax.f32 %v202, %v225
    %v227 = vrot.slane %v226, 2
    %v228 = vmax.f32 %v226, %v227
    %v229 = vrot.slane %v228, 1
    %v230 = vmax.f32 %v228, %v229
    %v231 = vrot.slane %v203, 4
    %v232 = vmax.f32 %v203, %v231
    %v233 = vrot.slane %v232, 2
    %v234 = vmax.f32 %v232, %v233
    %v235 = vrot.slane %v234, 1
    %v236 = vmax.f32 %v234, %v235
    %v237 = vrot.slane %v204, 4
    %v238 = vmax.f32 %v204, %v237
    %v239 = vrot.slane %v238, 2
    %v240 = vmax.f32 %v238, %v239
    %v241 = vrot.slane %v240, 1
    %v242 = vmax.f32 %v240, %v241
    %v243 = vrot.slane %v205, 4
    %v244 = vmax.f32 %v205, %v243
    %v245 = vrot.slane %v244, 2
    %v246 = vmax.f32 %v244, %v245
    %v247 = vrot.slane %v246, 1
    %v248 = vmax.f32 %v246, %v247
    %v249 = vrot.slane %v206, 4
    %v250 = vmax.f32 %v206, %v249
    %v251 = vrot.slane %v250, 2
    %v252 = vmax.f32 %v250, %v251
    %v253 = vrot.slane %v252, 1
    %v254 = vmax.f32 %v252, %v253
    %v255 = vsub.f32 %v199, %v212
    %v256 = vsub.f32 %v200, %v218
    %v257 = vsub.f32 %v201, %v224
    %v258 = vsub.f32 %v202, %v230
    %v259 = vsub.f32 %v203, %v236
    %v260 = vsub.f32 %v204, %v242
    %v261 = vsub.f32 %v205, %v248
    %v262 = vsub.f32 %v206, %v254
    %v263 = vmul.f32 %v255, 1.442695
    %v264 = vpow.pop %v263
    %v265 = vmul.f32 %v256, 1.442695
    %v266 = vpow.pop %v265
    %v267 = vmul.f32 %v257, 1.442695
    %v268 = vpow.pop %v267
    %v269 = vmul.f32 %v258, 1.442695
    %v270 = vpow.pop %v269
    %v271 = vmul.f32 %v259, 1.442695
    %v272 = vpow.pop %v271
    %v273 = vmul.f32 %v260, 1.442695
    %v274 = vpow.pop %v273
    %v275 = vmul.f32 %v261, 1.442695
    %v276 = vpow.pop %v275
    %v277 = vmul.f32 %v262, 1.442695
    %v278 = vpow.pop %v277
    %v279 = vrot.slane %v264, 4
    %v280 = vadd.f32 %v264, %v279
    %v281 = vrot.slane %v280, 2
    %v282 = vadd.f32 %v280, %v281
    %v283 = vrot.slane %v282, 1
    %v284 = vadd.f32 %v282, %v283
    %v285 = vrot.slane %v266, 4
    %v286 = vadd.f32 %v266, %v285
    %v287 = vrot.slane %v286, 2
    %v288 = vadd.f32 %v286, %v287
    %v289 = vrot.slane %v288, 1
    %v290 = vadd.f32 %v288, %v289
    %v291 = vrot.slane %v268, 4
    %v292 = vadd.f32 %v268, %v291
    %v293 = vrot.slane %v292, 2
    %v294 = vadd.f32 %v292, %v293
    %v295 = vrot.slane %v294, 1
    %v296 = vadd.f32 %v294, %v295
    %v297 = vrot.slane %v270, 4
    %v298 = vadd.f32 %v270, %v297
    %v299 = vrot.slane %v298, 2
    %v300 = vadd.f32 %v298, %v299
    %v301 = vrot.slane %v300, 1
    %v302 = vadd.f32 %v300, %v301
    %v303 = vrot.slane %v272, 4
    %v304 = vadd.f32 %v272, %v303
    %v305 = vrot.slane %v304, 2
    %v306 = vadd.f32 %v304, %v305
    %v307 = vrot.slane %v306, 1
    %v308 = vadd.f32 %v306, %v307
    %v309 = vrot.slane %v274, 4
    %v310 = vadd.f32 %v274, %v309
    %v311 = vrot.slane %v310, 2
    %v312 = vadd.f32 %v310, %v311
    %v313 = vrot.slane %v312, 1
    %v314 = vadd.f32 %v312, %v313
    %v315 = vrot.slane %v276, 4
    %v316 = vadd.f32 %v276, %v315
    %v317 = vrot.slane %v316, 2
    %v318 = vadd.f32 %v316, %v317
    %v319 = vrot.slane %v318, 1
    %v320 = vadd.f32 %v318, %v319
    %v321 = vrot.slane %v278, 4
    %v322 = vadd.f32 %v278, %v321
    %v323 = vrot.slane %v322, 2
    %v324 = vadd.f32 %v322, %v323
    %v325 = vrot.slane %v324, 1
    %v326 = vadd.f32 %v324, %v325
    %v327 = vrcp.pop %v284
    %v328 = vrcp.pop %v290
    %v329 = vrcp.pop %v296
    %v330 = vrcp.pop %v302
    %v331 = vrcp.pop %v308
    %v332 = vrcp.pop %v314
    %v333 = vrcp.pop %v320
    %v334 = vrcp.pop %v326
    %v335 = vmul.f32 %v264, %v327
    %v336 = vmul.f32 %v266, %v328
    %v337 = vmul.f32 %v268, %v329
    %v338 = vmul.f32 %v270, %v330
    %v339 = vmul.f32 %v272, %v331
    %v340 = vmul.f32 %v274, %v332
    %v341 = vmul.f32 %v276, %v333
    %v342 = vmul.f32 %v278, %v334
    %s343 = scalar_lea.vmem [#allocation7], 128
    %v344 = vld [vmem:[%s343] sm:$0xff]
    %v345 = vld [vmem:[%s343 + $0x8] sm:$0xff]
    %v346 = vld [vmem:[%s343 + $0x10] sm:$0xff]
    %v347 = vld [vmem:[%s343 + $0x18] sm:$0xff]
    %v348 = vld [vmem:[%s343 + $0x20] sm:$0xff]
    %v349 = vld [vmem:[%s343 + $0x28] sm:$0xff]
    %v350 = vld [vmem:[%s343 + $0x30] sm:$0xff]
    %v351 = vld [vmem:[%s343 + $0x38] sm:$0xff]
    %v352 = vld [vmem:[%s343 + $0x40] sm:$0xff]
    %v353 = vld [vmem:[%s343 + $0x48] sm:$0xff]
    %v354 = vld [vmem:[%s343 + $0x50] sm:$0xff]
    %v355 = vld [vmem:[%s343 + $0x58] sm:$0xff]
    %v356 = vld [vmem:[%s343 + $0x60] sm:$0xff]
    %v357 = vld [vmem:[%s343 + $0x68] sm:$0xff]
    %v358 = vld [vmem:[%s343 + $0x70] sm:$0xff]
    %v359 = vld [vmem:[%s343 + $0x78] sm:$0xff]
    %360 = vmatprep.subr.mxu0 0.0
    %361 = vmatpush1.msra.mxu0 %v359
    %362 = vmatprep.subr.mxu0 0.0
    %363 = vmatpush1.msra.mxu0 %v358
    %364 = vmatprep.subr.mxu0 0.0
    %365 = vmatpush1.msra.mxu0 %v357
    %366 = vmatprep.subr.mxu0 0.0
    %367 = vmatpush1.msra.mxu0 %v356
    %368 = vmatprep.subr.mxu0 0.0
    %369 = vmatpush1.msra.mxu0 %v355
    %370 = vmatprep.subr.mxu0 0.0
    %371 = vmatpush1.msra.mxu0 %v354
    %372 = vmatprep.subr.mxu0 0.0
    %373 = vmatpush1.msra.mxu0 %v353
    %374 = vmatprep.subr.mxu0 0.0
    %375 = vmatpush1.msra.mxu0 %v352
    %376 = vmatprep.subr.mxu0 0.0
    %377 = vmatpush1.msra.mxu0 %v351
    %378 = vmatprep.subr.mxu0 0.0
    %379 = vmatpush1.msra.mxu0 %v350
    %380 = vmatprep.subr.mxu0 0.0
    %381 = vmatpush1.msra.mxu0 %v349
    %382 = vmatprep.subr.mxu0 0.0
    %383 = vmatpush1.msra.mxu0 %v348
    %384 = vmatprep.subr.mxu0 0.0
    %385 = vmatpush1.msra.mxu0 %v347
    %386 = vmatprep.subr.mxu0 0.0
    %387 = vmatpush1.msra.mxu0 %v346
    %388 = vmatprep.subr.mxu0 0.0
    %389 = vmatpush1.msra.mxu0 %v345
    %390 = vmatprep.subr.mxu0 0.0
    %391 = vmatpush1.msra.mxu0 %v344
    %392 = vmatprep.subr.mxu0 0.0
    %393 = vmatpush2.msra.mxu0 0.0
    %394 = vmatprep.subr.mxu0 0.0
    %395 = vmatpush2.msra.mxu0 0.0
    %396 = vmatprep.subr.mxu0 0.0
    %397 = vmatpush2.msra.mxu0 0.0
    %398 = vmatprep.subr.mxu0 0.0
    %399 = vmatpush2.msra.mxu0 0.0
    %400 = vmatprep.subr.mxu0 0.0
    %401 = vmatpush2.msra.mxu0 0.0
    %402 = vmatprep.subr.mxu0 0.0
    %403 = vmatpush2.msra.mxu0 0.0
    %404 = vmatprep.subr.mxu0 0.0
    %405 = vmatpush2.msra.mxu0 0.0
    %406 = vmatprep.subr.mxu0 0.0
    %407 = vmatpush2.msra.mxu0 0.0
    %408 = vmatprep.subr.mxu0 0.0
    %409 = vmatpush2.msra.mxu0 0.0
    %410 = vmatprep.subr.mxu0 0.0
    %411 = vmatpush2.msra.mxu0 0.0
    %412 = vmatprep.subr.mxu0 0.0
    %413 = vmatpush2.msra.mxu0 0.0
    %414 = vmatprep.subr.mxu0 0.0
    %415 = vmatpush2.msra.mxu0 0.0
    %416 = vmatprep.subr.mxu0 0.0
    %417 = vmatpush2.msra.mxu0 0.0
    %418 = vmatprep.subr.mxu0 0.0
    %419 = vmatpush2.msra.mxu0 0.0
    %420 = vmatprep.subr.mxu0 0.0
    %421 = vmatpush2.msra.mxu0 0.0
    %422 = vmatprep.subr.mxu0 0.0
    %423 = vmatpush2.msra.mxu0 0.0
    %424 = vmatprep.mubr.f32.mxu0 0.0
    %425 = vmatmul.mubr.f32.gmra.mxu0 %v335
    %v426 = vpop.f32.mrf.mxu0
    %v427 = vadd.f32 0.0, %v426
    %v428 = vpop.f32.mrf.mxu0
    %429 = vmatprep.mubr.f32.mxu0 0.0
    %430 = vmatmul.mubr.f32.gmra.mxu0 %v336
    %v431 = vpop.f32.mrf.mxu0
    %v432 = vadd.f32 0.0, %v431
    %v433 = vpop.f32.mrf.mxu0
    %434 = vmatprep.mubr.f32.mxu0 0.0
    %435 = vmatmul.mubr.f32.gmra.mxu0 %v337
    %v436 = vpop.f32.mrf.mxu0
    %v437 = vadd.f32 0.0, %v436
    %v438 = vpop.f32.mrf.mxu0
    %439 = vmatprep.mubr.f32.mxu0 0.0
    %440 = vmatmul.mubr.f32.gmra.mxu0 %v338
    %v441 = vpop.f32.mrf.mxu0
    %v442 = vadd.f32 0.0, %v441
    %v443 = vpop.f32.mrf.mxu0
    %444 = vmatprep.mubr.f32.mxu0 0.0
    %445 = vmatmul.mubr.f32.gmra.mxu0 %v339
    %v446 = vpop.f32.mrf.mxu0
    %v447 = vadd.f32 0.0, %v446
    %v448 = vpop.f32.mrf.mxu0
    %449 = vmatprep.mubr.f32.mxu0 0.0
    %450 = vmatmul.mubr.f32.gmra.mxu0 %v340
    %v451 = vpop.f32.mrf.mxu0
    %v452 = vadd.f32 0.0, %v451
    %v453 = vpop.f32.mrf.mxu0
    %454 = vmatprep.mubr.f32.mxu0 0.0
    %455 = vmatmul.mubr.f32.gmra.mxu0 %v341
    %v456 = vpop.f32.mrf.mxu0
    %v457 = vadd.f32 0.0, %v456
    %v458 = vpop.f32.mrf.mxu0
    %459 = vmatprep.mubr.f32.mxu0 0.0
    %460 = vmatmul.mubr.f32.gmra.mxu0 %v342
    %v461 = vpop.f32.mrf.mxu0
    %v462 = vadd.f32 0.0, %v461
    %v463 = vpop.f32.mrf.mxu0
    %464 = vdwg.mxu0
    %v465 = vmul.f32 %v427, %v69
    %v466 = vmul.f32 %v432, %v70
    %v467 = vmul.f32 %v437, %v71
    %v468 = vmul.f32 %v442, %v72
    %v469 = vmul.f32 %v447, %v73
    %v470 = vmul.f32 %v452, %v74
    %v471 = vmul.f32 %v457, %v75
    %v472 = vmul.f32 %v462, %v76
    %v473 = vrot.slane %v465, 4
    %v474 = vadd.f32 %v465, %v473
    %v475 = vrot.slane %v474, 2
    %v476 = vadd.f32 %v474, %v475
    %v477 = vrot.slane %v476, 1
    %v478 = vadd.f32 %v476, %v477
    %v479 = vrot.slane %v466, 4
    %v480 = vadd.f32 %v466, %v479
    %v481 = vrot.slane %v480, 2
    %v482 = vadd.f32 %v480, %v481
    %v483 = vrot.slane %v482, 1
    %v484 = vadd.f32 %v482, %v483
    %v485 = vrot.slane %v467, 4
    %v486 = vadd.f32 %v467, %v485
    %v487 = vrot.slane %v486, 2
    %v488 = vadd.f32 %v486, %v487
    %v489 = vrot.slane %v488, 1
    %v490 = vadd.f32 %v488, %v489
    %v491 = vrot.slane %v468, 4
    %v492 = vadd.f32 %v468, %v491
    %v493 = vrot.slane %v492, 2
    %v494 = vadd.f32 %v492, %v493
    %v495 = vrot.slane %v494, 1
    %v496 = vadd.f32 %v494, %v495
    %v497 = vrot.slane %v469, 4
    %v498 = vadd.f32 %v469, %v497
    %v499 = vrot.slane %v498, 2
    %v500 = vadd.f32 %v498, %v499
    %v501 = vrot.slane %v500, 1
    %v502 = vadd.f32 %v500, %v501
    %v503 = vrot.slane %v470, 4
    %v504 = vadd.f32 %v470, %v503
    %v505 = vrot.slane %v504, 2
    %v506 = vadd.f32 %v504, %v505
    %v507 = vrot.slane %v506, 1
    %v508 = vadd.f32 %v506, %v507
    %v509 = vrot.slane %v471, 4
    %v510 = vadd.f32 %v471, %v509
    %v511 = vrot.slane %v510, 2
    %v512 = vadd.f32 %v510, %v511
    %v513 = vrot.slane %v512, 1
    %v514 = vadd.f32 %v512, %v513
    %v515 = vrot.slane %v472, 4
    %v516 = vadd.f32 %v472, %v515
    %v517 = vrot.slane %v516, 2
    %v518 = vadd.f32 %v516, %v517
    %v519 = vrot.slane %v518, 1
    %v520 = vadd.f32 %v518, %v519
    %s521 = scalar_lea.vmem [#allocation7], 256
    %v522 = vld [vmem:[%s521] sm:$0xff]
    %v523 = vld [vmem:[%s521 + $0x8] sm:$0xff]
    %v524 = vld [vmem:[%s521 + $0x10] sm:$0xff]
    %v525 = vld [vmem:[%s521 + $0x18] sm:$0xff]
    %v526 = vld [vmem:[%s521 + $0x20] sm:$0xff]
    %v527 = vld [vmem:[%s521 + $0x28] sm:$0xff]
    %v528 = vld [vmem:[%s521 + $0x30] sm:$0xff]
    %v529 = vld [vmem:[%s521 + $0x38] sm:$0xff]
    %v530 = vld [vmem:[%s521 + $0x40] sm:$0xff]
    %v531 = vld [vmem:[%s521 + $0x48] sm:$0xff]
    %v532 = vld [vmem:[%s521 + $0x50] sm:$0xff]
    %v533 = vld [vmem:[%s521 + $0x58] sm:$0xff]
    %v534 = vld [vmem:[%s521 + $0x60] sm:$0xff]
    %v535 = vld [vmem:[%s521 + $0x68] sm:$0xff]
    %v536 = vld [vmem:[%s521 + $0x70] sm:$0xff]
    %v537 = vld [vmem:[%s521 + $0x78] sm:$0xff]
    %v538 = vld [vmem:[#allocation8] sm:$0x1]
    %v539 = vlaneseq
    %v540 = vshrl.u32 %v539, 7
    %v541 = vsub.s32 0, %v540
    %v542 = vrot.slane %v538, %v541
    %vm551 = vcmask 1041409
    %v552 = vsel %vm551, %v484, %v478
    %vm553 = vcmask 1042434
    %v554 = vsel %vm553, %v490, %v552
    %vm555 = vcmask 1043459
    %v556 = vsel %vm555, %v496, %v554
    %vm557 = vcmask 1044484
    %v558 = vsel %vm557, %v502, %v556
    %vm559 = vcmask 1045509
    %v560 = vsel %vm559, %v508, %v558
    %vm561 = vcmask 1046534
    %v562 = vsel %vm561, %v514, %v560
    %vm563 = vcmask 1047559
    %v564 = vsel %vm563, %v520, %v562
    %566 = vmatprep.subr.mxu0 0.0
    %567 = vmatpush1.msra.mxu0 %v537
    %568 = vmatprep.subr.mxu0 0.0
    %569 = vmatpush1.msra.mxu0 %v536
    %570 = vmatprep.subr.mxu0 0.0
    %571 = vmatpush1.msra.mxu0 %v535
    %572 = vmatprep.subr.mxu0 0.0
    %573 = vmatpush1.msra.mxu0 %v534
    %574 = vmatprep.subr.mxu0 0.0
    %575 = vmatpush1.msra.mxu0 %v533
    %576 = vmatprep.subr.mxu0 0.0
    %577 = vmatpush1.msra.mxu0 %v532
    %578 = vmatprep.subr.mxu0 0.0
    %579 = vmatpush1.msra.mxu0 %v531
    %580 = vmatprep.subr.mxu0 0.0
    %581 = vmatpush1.msra.mxu0 %v530
    %582 = vmatprep.subr.mxu0 0.0
    %583 = vmatpush1.msra.mxu0 %v529
    %584 = vmatprep.subr.mxu0 0.0
    %585 = vmatpush1.msra.mxu0 %v528
    %586 = vmatprep.subr.mxu0 0.0
    %587 = vmatpush1.msra.mxu0 %v527
    %588 = vmatprep.subr.mxu0 0.0
    %589 = vmatpush1.msra.mxu0 %v526
    %590 = vmatprep.subr.mxu0 0.0
    %591 = vmatpush1.msra.mxu0 %v525
    %592 = vmatprep.subr.mxu0 0.0
    %593 = vmatpush1.msra.mxu0 %v524
    %594 = vmatprep.subr.mxu0 0.0
    %595 = vmatpush1.msra.mxu0 %v523
    %596 = vmatprep.subr.mxu0 0.0
    %597 = vmatpush1.msra.mxu0 %v522
    %598 = vmatprep.subr.mxu0 0.0
    %599 = vmatpush2.msra.mxu0 0.0
    %600 = vmatprep.subr.mxu0 0.0
    %601 = vmatpush2.msra.mxu0 0.0
    %602 = vmatprep.subr.mxu0 0.0
    %603 = vmatpush2.msra.mxu0 0.0
    %604 = vmatprep.subr.mxu0 0.0
    %605 = vmatpush2.msra.mxu0 0.0
    %606 = vmatprep.subr.mxu0 0.0
    %607 = vmatpush2.msra.mxu0 0.0
    %608 = vmatprep.subr.mxu0 0.0
    %609 = vmatpush2.msra.mxu0 0.0
    %610 = vmatprep.subr.mxu0 0.0
    %611 = vmatpush2.msra.mxu0 0.0
    %612 = vmatprep.subr.mxu0 0.0
    %613 = vmatpush2.msra.mxu0 0.0
    %614 = vmatprep.subr.mxu0 0.0
    %615 = vmatpush2.msra.mxu0 0.0
    %616 = vmatprep.subr.mxu0 0.0
    %617 = vmatpush2.msra.mxu0 0.0
    %618 = vmatprep.subr.mxu0 0.0
    %619 = vmatpush2.msra.mxu0 0.0
    %620 = vmatprep.subr.mxu0 0.0
    %621 = vmatpush2.msra.mxu0 0.0
    %622 = vmatprep.subr.mxu0 0.0
    %623 = vmatpush2.msra.mxu0 0.0
    %624 = vmatprep.subr.mxu0 0.0
    %625 = vmatpush2.msra.mxu0 0.0
    %626 = vmatprep.subr.mxu0 0.0
    %627 = vmatpush2.msra.mxu0 0.0
    %628 = vmatprep.subr.mxu0 0.0
    %629 = vmatpush2.msra.mxu0 0.0
    %630 = vmatprep.mubr.f32.mxu0 0.0
    %631 = vmatmul.mubr.f32.gmra.mxu0 %v564
    %v632 = vpop.f32.mrf.mxu0
    %v633 = vadd.f32 %v542, %v632
    %v634 = vpop.f32.mrf.mxu0
    %635 = vdwg.mxu0
    %vm636 = vcmp.ge.f32.partialorder %v633, 0.0
    %v637 = vmul.f32 %v633, 0.01
    %v638 = vsel %vm636, %v633, %v637
    %s639 = scalar_lea.vmem [#allocation7], 384
    %v640 = vld [vmem:[%s639] sm:$0xff]
    %v641 = vld [vmem:[%s639 + $0x8] sm:$0xff]
    %v642 = vld [vmem:[%s639 + $0x10] sm:$0xff]
    %v643 = vld [vmem:[%s639 + $0x18] sm:$0xff]
    %v644 = vld [vmem:[%s639 + $0x20] sm:$0xff]
    %v645 = vld [vmem:[%s639 + $0x28] sm:$0xff]
    %v646 = vld [vmem:[%s639 + $0x30] sm:$0xff]
    %v647 = vld [vmem:[%s639 + $0x38] sm:$0xff]
    %v648 = vld [vmem:[%s639 + $0x40] sm:$0xff]
    %v649 = vld [vmem:[%s639 + $0x48] sm:$0xff]
    %v650 = vld [vmem:[%s639 + $0x50] sm:$0xff]
    %v651 = vld [vmem:[%s639 + $0x58] sm:$0xff]
    %v652 = vld [vmem:[%s639 + $0x60] sm:$0xff]
    %v653 = vld [vmem:[%s639 + $0x68] sm:$0xff]
    %v654 = vld [vmem:[%s639 + $0x70] sm:$0xff]
    %v655 = vld [vmem:[%s639 + $0x78] sm:$0xff]
    %v656 = vld [vmem:[#allocation8 + $0x1] sm:$0x1]
    %v657 = vlaneseq
    %v658 = vshrl.u32 %v657, 7
    %v659 = vsub.s32 0, %v658
    %v660 = vrot.slane %v656, %v659
    %661 = vmatprep.subr.mxu0 0.0
    %662 = vmatpush1.msra.mxu0 %v655
    %663 = vmatprep.subr.mxu0 0.0
    %664 = vmatpush1.msra.mxu0 %v654
    %665 = vmatprep.subr.mxu0 0.0
    %666 = vmatpush1.msra.mxu0 %v653
    %667 = vmatprep.subr.mxu0 0.0
    %668 = vmatpush1.msra.mxu0 %v652
    %669 = vmatprep.subr.mxu0 0.0
    %670 = vmatpush1.msra.mxu0 %v651
    %671 = vmatprep.subr.mxu0 0.0
    %672 = vmatpush1.msra.mxu0 %v650
    %673 = vmatprep.subr.mxu0 0.0
    %674 = vmatpush1.msra.mxu0 %v649
    %675 = vmatprep.subr.mxu0 0.0
    %676 = vmatpush1.msra.mxu0 %v648
    %677 = vmatprep.subr.mxu0 0.0
    %678 = vmatpush1.msra.mxu0 %v647
    %679 = vmatprep.subr.mxu0 0.0
    %680 = vmatpush1.msra.mxu0 %v646
    %681 = vmatprep.subr.mxu0 0.0
    %682 = vmatpush1.msra.mxu0 %v645
    %683 = vmatprep.subr.mxu0 0.0
    %684 = vmatpush1.msra.mxu0 %v644
    %685 = vmatprep.subr.mxu0 0.0
    %686 = vmatpush1.msra.mxu0 %v643
    %687 = vmatprep.subr.mxu0 0.0
    %688 = vmatpush1.msra.mxu0 %v642
    %689 = vmatprep.subr.mxu0 0.0
    %690 = vmatpush1.msra.mxu0 %v641
    %691 = vmatprep.subr.mxu0 0.0
    %692 = vmatpush1.msra.mxu0 %v640
    %693 = vmatprep.subr.mxu0 0.0
    %694 = vmatpush2.msra.mxu0 0.0
    %695 = vmatprep.subr.mxu0 0.0
    %696 = vmatpush2.msra.mxu0 0.0
    %697 = vmatprep.subr.mxu0 0.0
    %698 = vmatpush2.msra.mxu0 0.0
    %699 = vmatprep.subr.mxu0 0.0
    %700 = vmatpush2.msra.mxu0 0.0
    %701 = vmatprep.subr.mxu0 0.0
    %702 = vmatpush2.msra.mxu0 0.0
    %703 = vmatprep.subr.mxu0 0.0
    %704 = vmatpush2.msra.mxu0 0.0
    %705 = vmatprep.subr.mxu0 0.0
    %706 = vmatpush2.msra.mxu0 0.0
    %707 = vmatprep.subr.mxu0 0.0
    %708 = vmatpush2.msra.mxu0 0.0
    %709 = vmatprep.subr.mxu0 0.0
    %710 = vmatpush2.msra.mxu0 0.0
    %711 = vmatprep.subr.mxu0 0.0
    %712 = vmatpush2.msra.mxu0 0.0
    %713 = vmatprep.subr.mxu0 0.0
    %714 = vmatpush2.msra.mxu0 0.0
    %715 = vmatprep.subr.mxu0 0.0
    %716 = vmatpush2.msra.mxu0 0.0
    %717 = vmatprep.subr.mxu0 0.0
    %718 = vmatpush2.msra.mxu0 0.0
    %719 = vmatprep.subr.mxu0 0.0
    %720 = vmatpush2.msra.mxu0 0.0
    %721 = vmatprep.subr.mxu0 0.0
    %722 = vmatpush2.msra.mxu0 0.0
    %723 = vmatprep.subr.mxu0 0.0
    %724 = vmatpush2.msra.mxu0 0.0
    %725 = vmatprep.mubr.f32.mxu0 0.0
    %726 = vmatmul.mubr.f32.gmra.mxu0 %v638
    %v727 = vpop.f32.mrf.mxu0
    %v728 = vadd.f32 %v660, %v727
    %v729 = vpop.f32.mrf.mxu0
    %730 = vdwg.mxu0
    %731 = vmax.xlane.f32.xlu0 %v728
    %v732 = vpop.xlane.xlu0 %731
    %v733 = vsub.f32 %v728, %v732
    %v734 = vmul.f32 %v733, 1.442695
    %v735 = vpow.pop %v734
    %s736 = scalar_lea.vmem [#allocation7], 512
    %v737 = vld [vmem:[%s736] sm:$0xff]
    %v738 = vld [vmem:[%s736 + $0x8] sm:$0xff]
    %v739 = vld [vmem:[%s736 + $0x10] sm:$0xff]
    %v740 = vld [vmem:[%s736 + $0x18] sm:$0xff]
    %v741 = vld [vmem:[%s736 + $0x20] sm:$0xff]
    %v742 = vld [vmem:[%s736 + $0x28] sm:$0xff]
    %v743 = vld [vmem:[%s736 + $0x30] sm:$0xff]
    %v744 = vld [vmem:[%s736 + $0x38] sm:$0xff]
    %v745 = vld [vmem:[%s736 + $0x40] sm:$0xff]
    %v746 = vld [vmem:[%s736 + $0x48] sm:$0xff]
    %v747 = vld [vmem:[%s736 + $0x50] sm:$0xff]
    %v748 = vld [vmem:[%s736 + $0x58] sm:$0xff]
    %v749 = vld [vmem:[%s736 + $0x60] sm:$0xff]
    %v750 = vld [vmem:[%s736 + $0x68] sm:$0xff]
    %v751 = vld [vmem:[%s736 + $0x70] sm:$0xff]
    %v752 = vld [vmem:[%s736 + $0x78] sm:$0xff]
    %753 = vmatprep.subr.mxu0 0.0
    %754 = vmatpush1.msra.mxu0 %v752
    %755 = vmatprep.subr.mxu0 0.0
    %756 = vmatpush1.msra.mxu0 %v751
    %757 = vmatprep.subr.mxu0 0.0
    %758 = vmatpush1.msra.mxu0 %v750
    %759 = vmatprep.subr.mxu0 0.0
    %760 = vmatpush1.msra.mxu0 %v749
    %761 = vmatprep.subr.mxu0 0.0
    %762 = vmatpush1.msra.mxu0 %v748
    %763 = vmatprep.subr.mxu0 0.0
    %764 = vmatpush1.msra.mxu0 %v747
    %765 = vmatprep.subr.mxu0 0.0
    %766 = vmatpush1.msra.mxu0 %v746
    %767 = vmatprep.subr.mxu0 0.0
    %768 = vmatpush1.msra.mxu0 %v745
    %769 = vmatprep.subr.mxu0 0.0
    %770 = vmatpush1.msra.mxu0 %v744
    %771 = vmatprep.subr.mxu0 0.0
    %772 = vmatpush1.msra.mxu0 %v743
    %773 = vmatprep.subr.mxu0 0.0
    %774 = vmatpush1.msra.mxu0 %v742
    %775 = vmatprep.subr.mxu0 0.0
    %776 = vmatpush1.msra.mxu0 %v741
    %777 = vmatprep.subr.mxu0 0.0
    %778 = vmatpush1.msra.mxu0 %v740
    %779 = vmatprep.subr.mxu0 0.0
    %780 = vmatpush1.msra.mxu0 %v739
    %781 = vmatprep.subr.mxu0 0.0
    %782 = vmatpush1.msra.mxu0 %v738
    %783 = vmatprep.subr.mxu0 0.0
    %784 = vmatpush1.msra.mxu0 %v737
    %785 = vmatprep.subr.mxu0 0.0
    %786 = vmatpush2.msra.mxu0 0.0
    %787 = vmatprep.subr.mxu0 0.0
    %788 = vmatpush2.msra.mxu0 0.0
    %789 = vmatprep.subr.mxu0 0.0
    %790 = vmatpush2.msra.mxu0 0.0
    %791 = vmatprep.subr.mxu0 0.0
    %792 = vmatpush2.msra.mxu0 0.0
    %793 = vmatprep.subr.mxu0 0.0
    %794 = vmatpush2.msra.mxu0 0.0
    %795 = vmatprep.subr.mxu0 0.0
    %796 = vmatpush2.msra.mxu0 0.0
    %797 = vmatprep.subr.mxu0 0.0
    %798 = vmatpush2.msra.mxu0 0.0
    %799 = vmatprep.subr.mxu0 0.0
    %800 = vmatpush2.msra.mxu0 0.0
    %801 = vmatprep.subr.mxu0 0.0
    %802 = vmatpush2.msra.mxu0 0.0
    %803 = vmatprep.subr.mxu0 0.0
    %804 = vmatpush2.msra.mxu0 0.0
    %805 = vmatprep.subr.mxu0 0.0
    %806 = vmatpush2.msra.mxu0 0.0
    %807 = vmatprep.subr.mxu0 0.0
    %808 = vmatpush2.msra.mxu0 0.0
    %809 = vmatprep.subr.mxu0 0.0
    %810 = vmatpush2.msra.mxu0 0.0
    %811 = vmatprep.subr.mxu0 0.0
    %812 = vmatpush2.msra.mxu0 0.0
    %813 = vmatprep.subr.mxu0 0.0
    %814 = vmatpush2.msra.mxu0 0.0
    %815 = vmatprep.subr.mxu0 0.0
    %816 = vmatpush2.msra.mxu0 0.0
    %817 = vmatprep.mubr.f32.mxu0 0.0
    %818 = vmatmul.mubr.f32.gmra.mxu0 %v735
    %v819 = vpop.f32.mrf.mxu0
    %v820 = vadd.f32 0.0, %v819
    %v821 = vpop.f32.mrf.mxu0
    %822 = vdwg.mxu0
    %v823 = vmax.f32 %v820, 1e-30
    %v824 = vrcp.pop %v823
    %v825 = vmul.f32 %v735, %v824
    %s826 = scalar_lea.vmem [#allocation7], 640
    %v827 = vld [vmem:[%s826] sm:$0xff]
    %v828 = vld [vmem:[%s826 + $0x8] sm:$0xff]
    %v829 = vld [vmem:[%s826 + $0x10] sm:$0xff]
    %v830 = vld [vmem:[%s826 + $0x18] sm:$0xff]
    %v831 = vld [vmem:[%s826 + $0x20] sm:$0xff]
    %v832 = vld [vmem:[%s826 + $0x28] sm:$0xff]
    %v833 = vld [vmem:[%s826 + $0x30] sm:$0xff]
    %v834 = vld [vmem:[%s826 + $0x38] sm:$0xff]
    %v835 = vld [vmem:[%s826 + $0x40] sm:$0xff]
    %v836 = vld [vmem:[%s826 + $0x48] sm:$0xff]
    %v837 = vld [vmem:[%s826 + $0x50] sm:$0xff]
    %v838 = vld [vmem:[%s826 + $0x58] sm:$0xff]
    %v839 = vld [vmem:[%s826 + $0x60] sm:$0xff]
    %v840 = vld [vmem:[%s826 + $0x68] sm:$0xff]
    %v841 = vld [vmem:[%s826 + $0x70] sm:$0xff]
    %v842 = vld [vmem:[%s826 + $0x78] sm:$0xff]
    %843 = vmatprep.subr.mxu0 0.0
    %844 = vmatpush1.msra.mxu0 %v842
    %845 = vmatprep.subr.mxu0 0.0
    %846 = vmatpush1.msra.mxu0 %v841
    %847 = vmatprep.subr.mxu0 0.0
    %848 = vmatpush1.msra.mxu0 %v840
    %849 = vmatprep.subr.mxu0 0.0
    %850 = vmatpush1.msra.mxu0 %v839
    %851 = vmatprep.subr.mxu0 0.0
    %852 = vmatpush1.msra.mxu0 %v838
    %853 = vmatprep.subr.mxu0 0.0
    %854 = vmatpush1.msra.mxu0 %v837
    %855 = vmatprep.subr.mxu0 0.0
    %856 = vmatpush1.msra.mxu0 %v836
    %857 = vmatprep.subr.mxu0 0.0
    %858 = vmatpush1.msra.mxu0 %v835
    %859 = vmatprep.subr.mxu0 0.0
    %860 = vmatpush1.msra.mxu0 %v834
    %861 = vmatprep.subr.mxu0 0.0
    %862 = vmatpush1.msra.mxu0 %v833
    %863 = vmatprep.subr.mxu0 0.0
    %864 = vmatpush1.msra.mxu0 %v832
    %865 = vmatprep.subr.mxu0 0.0
    %866 = vmatpush1.msra.mxu0 %v831
    %867 = vmatprep.subr.mxu0 0.0
    %868 = vmatpush1.msra.mxu0 %v830
    %869 = vmatprep.subr.mxu0 0.0
    %870 = vmatpush1.msra.mxu0 %v829
    %871 = vmatprep.subr.mxu0 0.0
    %872 = vmatpush1.msra.mxu0 %v828
    %873 = vmatprep.subr.mxu0 0.0
    %874 = vmatpush1.msra.mxu0 %v827
    %875 = vmatprep.subr.mxu0 0.0
    %876 = vmatpush2.msra.mxu0 0.0
    %877 = vmatprep.subr.mxu0 0.0
    %878 = vmatpush2.msra.mxu0 0.0
    %879 = vmatprep.subr.mxu0 0.0
    %880 = vmatpush2.msra.mxu0 0.0
    %881 = vmatprep.subr.mxu0 0.0
    %882 = vmatpush2.msra.mxu0 0.0
    %883 = vmatprep.subr.mxu0 0.0
    %884 = vmatpush2.msra.mxu0 0.0
    %885 = vmatprep.subr.mxu0 0.0
    %886 = vmatpush2.msra.mxu0 0.0
    %887 = vmatprep.subr.mxu0 0.0
    %888 = vmatpush2.msra.mxu0 0.0
    %889 = vmatprep.subr.mxu0 0.0
    %890 = vmatpush2.msra.mxu0 0.0
    %891 = vmatprep.subr.mxu0 0.0
    %892 = vmatpush2.msra.mxu0 0.0
    %893 = vmatprep.subr.mxu0 0.0
    %894 = vmatpush2.msra.mxu0 0.0
    %895 = vmatprep.subr.mxu0 0.0
    %896 = vmatpush2.msra.mxu0 0.0
    %897 = vmatprep.subr.mxu0 0.0
    %898 = vmatpush2.msra.mxu0 0.0
    %899 = vmatprep.subr.mxu0 0.0
    %900 = vmatpush2.msra.mxu0 0.0
    %901 = vmatprep.subr.mxu0 0.0
    %902 = vmatpush2.msra.mxu0 0.0
    %903 = vmatprep.subr.mxu0 0.0
    %904 = vmatpush2.msra.mxu0 0.0
    %905 = vmatprep.subr.mxu0 0.0
    %906 = vmatpush2.msra.mxu0 0.0
    %907 = vmatprep.mubr.f32.mxu0 0.0
    %908 = vmatmul.mubr.f32.gmra.mxu0 %v825
    %v909 = vpop.f32.mrf.mxu0
    %v910 = vadd.f32 0.0, %v909
    %v911 = vpop.f32.mrf.mxu0
    %912 = vdwg.mxu0
    %v913 = vmul.f32 %v910, %v638
    %s914 = scalar_lea.vmem [#allocation7], 768
    %v915 = vld [vmem:[%s914] sm:$0xff]
    %v916 = vld [vmem:[%s914 + $0x8] sm:$0xff]
    %v917 = vld [vmem:[%s914 + $0x10] sm:$0xff]
    %v918 = vld [vmem:[%s914 + $0x18] sm:$0xff]
    %v919 = vld [vmem:[%s914 + $0x20] sm:$0xff]
    %v920 = vld [vmem:[%s914 + $0x28] sm:$0xff]
    %v921 = vld [vmem:[%s914 + $0x30] sm:$0xff]
    %v922 = vld [vmem:[%s914 + $0x38] sm:$0xff]
    %v923 = vld [vmem:[%s914 + $0x40] sm:$0xff]
    %v924 = vld [vmem:[%s914 + $0x48] sm:$0xff]
    %v925 = vld [vmem:[%s914 + $0x50] sm:$0xff]
    %v926 = vld [vmem:[%s914 + $0x58] sm:$0xff]
    %v927 = vld [vmem:[%s914 + $0x60] sm:$0xff]
    %v928 = vld [vmem:[%s914 + $0x68] sm:$0xff]
    %v929 = vld [vmem:[%s914 + $0x70] sm:$0xff]
    %v930 = vld [vmem:[%s914 + $0x78] sm:$0xff]
    %v931 = vld [vmem:[#allocation8 + $0x2] sm:$0x1]
    %v932 = vlaneseq
    %v933 = vshrl.u32 %v932, 7
    %v934 = vsub.s32 0, %v933
    %v935 = vrot.slane %v931, %v934
    %936 = vmatprep.subr.mxu0 0.0
    %937 = vmatpush1.msra.mxu0 %v930
    %938 = vmatprep.subr.mxu0 0.0
    %939 = vmatpush1.msra.mxu0 %v929
    %940 = vmatprep.subr.mxu0 0.0
    %941 = vmatpush1.msra.mxu0 %v928
    %942 = vmatprep.subr.mxu0 0.0
    %943 = vmatpush1.msra.mxu0 %v927
    %944 = vmatprep.subr.mxu0 0.0
    %945 = vmatpush1.msra.mxu0 %v926
    %946 = vmatprep.subr.mxu0 0.0
    %947 = vmatpush1.msra.mxu0 %v925
    %948 = vmatprep.subr.mxu0 0.0
    %949 = vmatpush1.msra.mxu0 %v924
    %950 = vmatprep.subr.mxu0 0.0
    %951 = vmatpush1.msra.mxu0 %v923
    %952 = vmatprep.subr.mxu0 0.0
    %953 = vmatpush1.msra.mxu0 %v922
    %954 = vmatprep.subr.mxu0 0.0
    %955 = vmatpush1.msra.mxu0 %v921
    %956 = vmatprep.subr.mxu0 0.0
    %957 = vmatpush1.msra.mxu0 %v920
    %958 = vmatprep.subr.mxu0 0.0
    %959 = vmatpush1.msra.mxu0 %v919
    %960 = vmatprep.subr.mxu0 0.0
    %961 = vmatpush1.msra.mxu0 %v918
    %962 = vmatprep.subr.mxu0 0.0
    %963 = vmatpush1.msra.mxu0 %v917
    %964 = vmatprep.subr.mxu0 0.0
    %965 = vmatpush1.msra.mxu0 %v916
    %966 = vmatprep.subr.mxu0 0.0
    %967 = vmatpush1.msra.mxu0 %v915
    %968 = vmatprep.subr.mxu0 0.0
    %969 = vmatpush2.msra.mxu0 0.0
    %970 = vmatprep.subr.mxu0 0.0
    %971 = vmatpush2.msra.mxu0 0.0
    %972 = vmatprep.subr.mxu0 0.0
    %973 = vmatpush2.msra.mxu0 0.0
    %974 = vmatprep.subr.mxu0 0.0
    %975 = vmatpush2.msra.mxu0 0.0
    %976 = vmatprep.subr.mxu0 0.0
    %977 = vmatpush2.msra.mxu0 0.0
    %978 = vmatprep.subr.mxu0 0.0
    %979 = vmatpush2.msra.mxu0 0.0
    %980 = vmatprep.subr.mxu0 0.0
    %981 = vmatpush2.msra.mxu0 0.0
    %982 = vmatprep.subr.mxu0 0.0
    %983 = vmatpush2.msra.mxu0 0.0
    %984 = vmatprep.subr.mxu0 0.0
    %985 = vmatpush2.msra.mxu0 0.0
    %986 = vmatprep.subr.mxu0 0.0
    %987 = vmatpush2.msra.mxu0 0.0
    %988 = vmatprep.subr.mxu0 0.0
    %989 = vmatpush2.msra.mxu0 0.0
    %990 = vmatprep.subr.mxu0 0.0
    %991 = vmatpush2.msra.mxu0 0.0
    %992 = vmatprep.subr.mxu0 0.0
    %993 = vmatpush2.msra.mxu0 0.0
    %994 = vmatprep.subr.mxu0 0.0
    %995 = vmatpush2.msra.mxu0 0.0
    %996 = vmatprep.subr.mxu0 0.0
    %997 = vmatpush2.msra.mxu0 0.0
    %998 = vmatprep.subr.mxu0 0.0
    %999 = vmatpush2.msra.mxu0 0.0
    %1000 = vmatprep.mubr.f32.mxu0 0.0
    %1001 = vmatmul.mubr.f32.gmra.mxu0 %v913
    %v1002 = vpop.f32.mrf.mxu0
    %v1003 = vadd.f32 %v935, %v1002
    %v1004 = vpop.f32.mrf.mxu0
    %1005 = vdwg.mxu0
    %vm1006 = vcmp.ge.f32.partialorder %v1003, 0.0
    %v1007 = vmul.f32 %v1003, 0.01
    %v1008 = vsel %vm1006, %v1003, %v1007
    %s1009 = scalar_lea.vmem [#allocation7], 896
    %v1010 = vld [vmem:[%s1009] sm:$0xff]
    %v1011 = vld [vmem:[%s1009 + $0x8] sm:$0xff]
    %v1012 = vld [vmem:[%s1009 + $0x10] sm:$0xff]
    %v1013 = vld [vmem:[%s1009 + $0x18] sm:$0xff]
    %v1014 = vld [vmem:[%s1009 + $0x20] sm:$0xff]
    %v1015 = vld [vmem:[%s1009 + $0x28] sm:$0xff]
    %v1016 = vld [vmem:[%s1009 + $0x30] sm:$0xff]
    %v1017 = vld [vmem:[%s1009 + $0x38] sm:$0xff]
    %v1018 = vld [vmem:[%s1009 + $0x40] sm:$0xff]
    %v1019 = vld [vmem:[%s1009 + $0x48] sm:$0xff]
    %v1020 = vld [vmem:[%s1009 + $0x50] sm:$0xff]
    %v1021 = vld [vmem:[%s1009 + $0x58] sm:$0xff]
    %v1022 = vld [vmem:[%s1009 + $0x60] sm:$0xff]
    %v1023 = vld [vmem:[%s1009 + $0x68] sm:$0xff]
    %v1024 = vld [vmem:[%s1009 + $0x70] sm:$0xff]
    %v1025 = vld [vmem:[%s1009 + $0x78] sm:$0xff]
    %v1026 = vld [vmem:[#allocation8 + $0x3] sm:$0x1]
    %v1027 = vlaneseq
    %v1028 = vshrl.u32 %v1027, 7
    %v1029 = vsub.s32 0, %v1028
    %v1030 = vrot.slane %v1026, %v1029
    %1031 = vmatprep.subr.mxu0 0.0
    %1032 = vmatpush1.msra.mxu0 %v1025
    %1033 = vmatprep.subr.mxu0 0.0
    %1034 = vmatpush1.msra.mxu0 %v1024
    %1035 = vmatprep.subr.mxu0 0.0
    %1036 = vmatpush1.msra.mxu0 %v1023
    %1037 = vmatprep.subr.mxu0 0.0
    %1038 = vmatpush1.msra.mxu0 %v1022
    %1039 = vmatprep.subr.mxu0 0.0
    %1040 = vmatpush1.msra.mxu0 %v1021
    %1041 = vmatprep.subr.mxu0 0.0
    %1042 = vmatpush1.msra.mxu0 %v1020
    %1043 = vmatprep.subr.mxu0 0.0
    %1044 = vmatpush1.msra.mxu0 %v1019
    %1045 = vmatprep.subr.mxu0 0.0
    %1046 = vmatpush1.msra.mxu0 %v1018
    %1047 = vmatprep.subr.mxu0 0.0
    %1048 = vmatpush1.msra.mxu0 %v1017
    %1049 = vmatprep.subr.mxu0 0.0
    %1050 = vmatpush1.msra.mxu0 %v1016
    %1051 = vmatprep.subr.mxu0 0.0
    %1052 = vmatpush1.msra.mxu0 %v1015
    %1053 = vmatprep.subr.mxu0 0.0
    %1054 = vmatpush1.msra.mxu0 %v1014
    %1055 = vmatprep.subr.mxu0 0.0
    %1056 = vmatpush1.msra.mxu0 %v1013
    %1057 = vmatprep.subr.mxu0 0.0
    %1058 = vmatpush1.msra.mxu0 %v1012
    %1059 = vmatprep.subr.mxu0 0.0
    %1060 = vmatpush1.msra.mxu0 %v1011
    %1061 = vmatprep.subr.mxu0 0.0
    %1062 = vmatpush1.msra.mxu0 %v1010
    %1063 = vmatprep.subr.mxu0 0.0
    %1064 = vmatpush2.msra.mxu0 0.0
    %1065 = vmatprep.subr.mxu0 0.0
    %1066 = vmatpush2.msra.mxu0 0.0
    %1067 = vmatprep.subr.mxu0 0.0
    %1068 = vmatpush2.msra.mxu0 0.0
    %1069 = vmatprep.subr.mxu0 0.0
    %1070 = vmatpush2.msra.mxu0 0.0
    %1071 = vmatprep.subr.mxu0 0.0
    %1072 = vmatpush2.msra.mxu0 0.0
    %1073 = vmatprep.subr.mxu0 0.0
    %1074 = vmatpush2.msra.mxu0 0.0
    %1075 = vmatprep.subr.mxu0 0.0
    %1076 = vmatpush2.msra.mxu0 0.0
    %1077 = vmatprep.subr.mxu0 0.0
    %1078 = vmatpush2.msra.mxu0 0.0
    %1079 = vmatprep.subr.mxu0 0.0
    %1080 = vmatpush2.msra.mxu0 0.0
    %1081 = vmatprep.subr.mxu0 0.0
    %1082 = vmatpush2.msra.mxu0 0.0
    %1083 = vmatprep.subr.mxu0 0.0
    %1084 = vmatpush2.msra.mxu0 0.0
    %1085 = vmatprep.subr.mxu0 0.0
    %1086 = vmatpush2.msra.mxu0 0.0
    %1087 = vmatprep.subr.mxu0 0.0
    %1088 = vmatpush2.msra.mxu0 0.0
    %1089 = vmatprep.subr.mxu0 0.0
    %1090 = vmatpush2.msra.mxu0 0.0
    %1091 = vmatprep.subr.mxu0 0.0
    %1092 = vmatpush2.msra.mxu0 0.0
    %1093 = vmatprep.subr.mxu0 0.0
    %1094 = vmatpush2.msra.mxu0 0.0
    %1095 = vmatprep.mubr.f32.mxu0 0.0
    %1096 = vmatmul.mubr.f32.gmra.mxu0 %v1008
    %v1097 = vpop.f32.mrf.mxu0
    %v1098 = vadd.f32 %v1030, %v1097
    %v1099 = vpop.f32.mrf.mxu0
    %1100 = vdwg.mxu0
    %1101 = vmax.xlane.f32.xlu0 %v1098
    %v1102 = vpop.xlane.xlu0 %1101
    %v1103 = vsub.f32 %v1098, %v1102
    %v1104 = vmul.f32 %v1103, 1.442695
    %v1105 = vpow.pop %v1104
    %1106 = vadd.xlane.f32.xlu0 %v1105
    %v1107 = vpop.xlane.xlu0 %1106
    %v1108 = vrcp.pop %v1107
    %v1109 = vmul.f32 %v1105, %v1108
    %s1110 = scalar_lea.vmem [#allocation7], 1024
    %v1111 = vld [vmem:[%s1110] sm:$0xff]
    %v1112 = vld [vmem:[%s1110 + $0x8] sm:$0xff]
    %v1113 = vld [vmem:[%s1110 + $0x10] sm:$0xff]
    %v1114 = vld [vmem:[%s1110 + $0x18] sm:$0xff]
    %v1115 = vld [vmem:[%s1110 + $0x20] sm:$0xff]
    %v1116 = vld [vmem:[%s1110 + $0x28] sm:$0xff]
    %v1117 = vld [vmem:[%s1110 + $0x30] sm:$0xff]
    %v1118 = vld [vmem:[%s1110 + $0x38] sm:$0xff]
    %v1119 = vld [vmem:[%s1110 + $0x40] sm:$0xff]
    %v1120 = vld [vmem:[%s1110 + $0x48] sm:$0xff]
    %v1121 = vld [vmem:[%s1110 + $0x50] sm:$0xff]
    %v1122 = vld [vmem:[%s1110 + $0x58] sm:$0xff]
    %v1123 = vld [vmem:[%s1110 + $0x60] sm:$0xff]
    %v1124 = vld [vmem:[%s1110 + $0x68] sm:$0xff]
    %v1125 = vld [vmem:[%s1110 + $0x70] sm:$0xff]
    %v1126 = vld [vmem:[%s1110 + $0x78] sm:$0xff]
    %1127 = vmatprep.subr.mxu0 0.0
    %1128 = vmatpush1.msra.mxu0 %v1126
    %1129 = vmatprep.subr.mxu0 0.0
    %1130 = vmatpush1.msra.mxu0 %v1125
    %1131 = vmatprep.subr.mxu0 0.0
    %1132 = vmatpush1.msra.mxu0 %v1124
    %1133 = vmatprep.subr.mxu0 0.0
    %1134 = vmatpush1.msra.mxu0 %v1123
    %1135 = vmatprep.subr.mxu0 0.0
    %1136 = vmatpush1.msra.mxu0 %v1122
    %1137 = vmatprep.subr.mxu0 0.0
    %1138 = vmatpush1.msra.mxu0 %v1121
    %1139 = vmatprep.subr.mxu0 0.0
    %1140 = vmatpush1.msra.mxu0 %v1120
    %1141 = vmatprep.subr.mxu0 0.0
    %1142 = vmatpush1.msra.mxu0 %v1119
    %1143 = vmatprep.subr.mxu0 0.0
    %1144 = vmatpush1.msra.mxu0 %v1118
    %1145 = vmatprep.subr.mxu0 0.0
    %1146 = vmatpush1.msra.mxu0 %v1117
    %1147 = vmatprep.subr.mxu0 0.0
    %1148 = vmatpush1.msra.mxu0 %v1116
    %1149 = vmatprep.subr.mxu0 0.0
    %1150 = vmatpush1.msra.mxu0 %v1115
    %1151 = vmatprep.subr.mxu0 0.0
    %1152 = vmatpush1.msra.mxu0 %v1114
    %1153 = vmatprep.subr.mxu0 0.0
    %1154 = vmatpush1.msra.mxu0 %v1113
    %1155 = vmatprep.subr.mxu0 0.0
    %1156 = vmatpush1.msra.mxu0 %v1112
    %1157 = vmatprep.subr.mxu0 0.0
    %1158 = vmatpush1.msra.mxu0 %v1111
    %1159 = vmatprep.subr.mxu0 0.0
    %1160 = vmatpush2.msra.mxu0 0.0
    %1161 = vmatprep.subr.mxu0 0.0
    %1162 = vmatpush2.msra.mxu0 0.0
    %1163 = vmatprep.subr.mxu0 0.0
    %1164 = vmatpush2.msra.mxu0 0.0
    %1165 = vmatprep.subr.mxu0 0.0
    %1166 = vmatpush2.msra.mxu0 0.0
    %1167 = vmatprep.subr.mxu0 0.0
    %1168 = vmatpush2.msra.mxu0 0.0
    %1169 = vmatprep.subr.mxu0 0.0
    %1170 = vmatpush2.msra.mxu0 0.0
    %1171 = vmatprep.subr.mxu0 0.0
    %1172 = vmatpush2.msra.mxu0 0.0
    %1173 = vmatprep.subr.mxu0 0.0
    %1174 = vmatpush2.msra.mxu0 0.0
    %1175 = vmatprep.subr.mxu0 0.0
    %1176 = vmatpush2.msra.mxu0 0.0
    %1177 = vmatprep.subr.mxu0 0.0
    %1178 = vmatpush2.msra.mxu0 0.0
    %1179 = vmatprep.subr.mxu0 0.0
    %1180 = vmatpush2.msra.mxu0 0.0
    %1181 = vmatprep.subr.mxu0 0.0
    %1182 = vmatpush2.msra.mxu0 0.0
    %1183 = vmatprep.subr.mxu0 0.0
    %1184 = vmatpush2.msra.mxu0 0.0
    %1185 = vmatprep.subr.mxu0 0.0
    %1186 = vmatpush2.msra.mxu0 0.0
    %1187 = vmatprep.subr.mxu0 0.0
    %1188 = vmatpush2.msra.mxu0 0.0
    %1189 = vmatprep.subr.mxu0 0.0
    %1190 = vmatpush2.msra.mxu0 0.0
    %1191 = vmatprep.mubr.f32.mxu0 0.0
    %1192 = vmatmul.mubr.f32.gmra.mxu0 %v1109
    %v1193 = vpop.f32.mrf.mxu0
    %v1194 = vadd.f32 0.0, %v1193
    %v1195 = vpop.f32.mrf.mxu0
    %1196 = vdwg.mxu0
    %v1197 = vmul.f32 %v1194, %v1008
    %s1198 = scalar_lea.vmem [#allocation7], 1152
    %v1199 = vld [vmem:[%s1198] sm:$0xff]
    %v1200 = vld [vmem:[%s1198 + $0x8] sm:$0xff]
    %v1201 = vld [vmem:[%s1198 + $0x10] sm:$0xff]
    %v1202 = vld [vmem:[%s1198 + $0x18] sm:$0xff]
    %v1203 = vld [vmem:[%s1198 + $0x20] sm:$0xff]
    %v1204 = vld [vmem:[%s1198 + $0x28] sm:$0xff]
    %v1205 = vld [vmem:[%s1198 + $0x30] sm:$0xff]
    %v1206 = vld [vmem:[%s1198 + $0x38] sm:$0xff]
    %v1207 = vld [vmem:[%s1198 + $0x40] sm:$0xff]
    %v1208 = vld [vmem:[%s1198 + $0x48] sm:$0xff]
    %v1209 = vld [vmem:[%s1198 + $0x50] sm:$0xff]
    %v1210 = vld [vmem:[%s1198 + $0x58] sm:$0xff]
    %v1211 = vld [vmem:[%s1198 + $0x60] sm:$0xff]
    %v1212 = vld [vmem:[%s1198 + $0x68] sm:$0xff]
    %v1213 = vld [vmem:[%s1198 + $0x70] sm:$0xff]
    %v1214 = vld [vmem:[%s1198 + $0x78] sm:$0xff]
    %v1215 = vld [vmem:[#allocation8 + $0x4] sm:$0x1]
    %v1216 = vlaneseq
    %v1217 = vshrl.u32 %v1216, 7
    %v1218 = vsub.s32 0, %v1217
    %v1219 = vrot.slane %v1215, %v1218
    %1220 = vmatprep.subr.mxu0 0.0
    %1221 = vmatpush1.msra.mxu0 %v1214
    %1222 = vmatprep.subr.mxu0 0.0
    %1223 = vmatpush1.msra.mxu0 %v1213
    %1224 = vmatprep.subr.mxu0 0.0
    %1225 = vmatpush1.msra.mxu0 %v1212
    %1226 = vmatprep.subr.mxu0 0.0
    %1227 = vmatpush1.msra.mxu0 %v1211
    %1228 = vmatprep.subr.mxu0 0.0
    %1229 = vmatpush1.msra.mxu0 %v1210
    %1230 = vmatprep.subr.mxu0 0.0
    %1231 = vmatpush1.msra.mxu0 %v1209
    %1232 = vmatprep.subr.mxu0 0.0
    %1233 = vmatpush1.msra.mxu0 %v1208
    %1234 = vmatprep.subr.mxu0 0.0
    %1235 = vmatpush1.msra.mxu0 %v1207
    %1236 = vmatprep.subr.mxu0 0.0
    %1237 = vmatpush1.msra.mxu0 %v1206
    %1238 = vmatprep.subr.mxu0 0.0
    %1239 = vmatpush1.msra.mxu0 %v1205
    %1240 = vmatprep.subr.mxu0 0.0
    %1241 = vmatpush1.msra.mxu0 %v1204
    %1242 = vmatprep.subr.mxu0 0.0
    %1243 = vmatpush1.msra.mxu0 %v1203
    %1244 = vmatprep.subr.mxu0 0.0
    %1245 = vmatpush1.msra.mxu0 %v1202
    %1246 = vmatprep.subr.mxu0 0.0
    %1247 = vmatpush1.msra.mxu0 %v1201
    %1248 = vmatprep.subr.mxu0 0.0
    %1249 = vmatpush1.msra.mxu0 %v1200
    %1250 = vmatprep.subr.mxu0 0.0
    %1251 = vmatpush1.msra.mxu0 %v1199
    %1252 = vmatprep.subr.mxu0 0.0
    %1253 = vmatpush2.msra.mxu0 0.0
    %1254 = vmatprep.subr.mxu0 0.0
    %1255 = vmatpush2.msra.mxu0 0.0
    %1256 = vmatprep.subr.mxu0 0.0
    %1257 = vmatpush2.msra.mxu0 0.0
    %1258 = vmatprep.subr.mxu0 0.0
    %1259 = vmatpush2.msra.mxu0 0.0
    %1260 = vmatprep.subr.mxu0 0.0
    %1261 = vmatpush2.msra.mxu0 0.0
    %1262 = vmatprep.subr.mxu0 0.0
    %1263 = vmatpush2.msra.mxu0 0.0
    %1264 = vmatprep.subr.mxu0 0.0
    %1265 = vmatpush2.msra.mxu0 0.0
    %1266 = vmatprep.subr.mxu0 0.0
    %1267 = vmatpush2.msra.mxu0 0.0
    %1268 = vmatprep.subr.mxu0 0.0
    %1269 = vmatpush2.msra.mxu0 0.0
    %1270 = vmatprep.subr.mxu0 0.0
    %1271 = vmatpush2.msra.mxu0 0.0
    %1272 = vmatprep.subr.mxu0 0.0
    %1273 = vmatpush2.msra.mxu0 0.0
    %1274 = vmatprep.subr.mxu0 0.0
    %1275 = vmatpush2.msra.mxu0 0.0
    %1276 = vmatprep.subr.mxu0 0.0
    %1277 = vmatpush2.msra.mxu0 0.0
    %1278 = vmatprep.subr.mxu0 0.0
    %1279 = vmatpush2.msra.mxu0 0.0
    %1280 = vmatprep.subr.mxu0 0.0
    %1281 = vmatpush2.msra.mxu0 0.0
    %1282 = vmatprep.subr.mxu0 0.0
    %1283 = vmatpush2.msra.mxu0 0.0
    %1284 = vmatprep.mubr.f32.mxu0 0.0
    %1285 = vmatmul.mubr.f32.gmra.mxu0 %v1197
    %v1286 = vpop.f32.mrf.mxu0
    %v1287 = vadd.f32 %v1219, %v1286
    %v1288 = vpop.f32.mrf.mxu0
    %1289 = vdwg.mxu0
    %vm1290 = vcmp.ge.f32.partialorder %v1287, 0.0
    %v1291 = vmul.f32 %v1287, 0.01
    %v1292 = vsel %vm1290, %v1287, %v1291
    %s1293 = scalar_lea.vmem [#allocation7], 1280
    %v1294 = vld [vmem:[%s1293] sm:$0xff]
    %v1295 = vld [vmem:[%s1293 + $0x8] sm:$0xff]
    %v1296 = vld [vmem:[%s1293 + $0x10] sm:$0xff]
    %v1297 = vld [vmem:[%s1293 + $0x18] sm:$0xff]
    %v1298 = vld [vmem:[%s1293 + $0x20] sm:$0xff]
    %v1299 = vld [vmem:[%s1293 + $0x28] sm:$0xff]
    %v1300 = vld [vmem:[%s1293 + $0x30] sm:$0xff]
    %v1301 = vld [vmem:[%s1293 + $0x38] sm:$0xff]
    %v1302 = vld [vmem:[%s1293 + $0x40] sm:$0xff]
    %v1303 = vld [vmem:[%s1293 + $0x48] sm:$0xff]
    %v1304 = vld [vmem:[%s1293 + $0x50] sm:$0xff]
    %v1305 = vld [vmem:[%s1293 + $0x58] sm:$0xff]
    %v1306 = vld [vmem:[%s1293 + $0x60] sm:$0xff]
    %v1307 = vld [vmem:[%s1293 + $0x68] sm:$0xff]
    %v1308 = vld [vmem:[%s1293 + $0x70] sm:$0xff]
    %v1309 = vld [vmem:[%s1293 + $0x78] sm:$0xff]
    %v1310 = vld [vmem:[#allocation8 + $0x5] sm:$0x1]
    %v1311 = vlaneseq
    %v1312 = vshrl.u32 %v1311, 7
    %v1313 = vsub.s32 0, %v1312
    %v1314 = vrot.slane %v1310, %v1313
    %1315 = vmatprep.subr.mxu0 0.0
    %1316 = vmatpush1.msra.mxu0 %v1309
    %1317 = vmatprep.subr.mxu0 0.0
    %1318 = vmatpush1.msra.mxu0 %v1308
    %1319 = vmatprep.subr.mxu0 0.0
    %1320 = vmatpush1.msra.mxu0 %v1307
    %1321 = vmatprep.subr.mxu0 0.0
    %1322 = vmatpush1.msra.mxu0 %v1306
    %1323 = vmatprep.subr.mxu0 0.0
    %1324 = vmatpush1.msra.mxu0 %v1305
    %1325 = vmatprep.subr.mxu0 0.0
    %1326 = vmatpush1.msra.mxu0 %v1304
    %1327 = vmatprep.subr.mxu0 0.0
    %1328 = vmatpush1.msra.mxu0 %v1303
    %1329 = vmatprep.subr.mxu0 0.0
    %1330 = vmatpush1.msra.mxu0 %v1302
    %1331 = vmatprep.subr.mxu0 0.0
    %1332 = vmatpush1.msra.mxu0 %v1301
    %1333 = vmatprep.subr.mxu0 0.0
    %1334 = vmatpush1.msra.mxu0 %v1300
    %1335 = vmatprep.subr.mxu0 0.0
    %1336 = vmatpush1.msra.mxu0 %v1299
    %1337 = vmatprep.subr.mxu0 0.0
    %1338 = vmatpush1.msra.mxu0 %v1298
    %1339 = vmatprep.subr.mxu0 0.0
    %1340 = vmatpush1.msra.mxu0 %v1297
    %1341 = vmatprep.subr.mxu0 0.0
    %1342 = vmatpush1.msra.mxu0 %v1296
    %1343 = vmatprep.subr.mxu0 0.0
    %1344 = vmatpush1.msra.mxu0 %v1295
    %1345 = vmatprep.subr.mxu0 0.0
    %1346 = vmatpush1.msra.mxu0 %v1294
    %1347 = vmatprep.subr.mxu0 0.0
    %1348 = vmatpush2.msra.mxu0 0.0
    %1349 = vmatprep.subr.mxu0 0.0
    %1350 = vmatpush2.msra.mxu0 0.0
    %1351 = vmatprep.subr.mxu0 0.0
    %1352 = vmatpush2.msra.mxu0 0.0
    %1353 = vmatprep.subr.mxu0 0.0
    %1354 = vmatpush2.msra.mxu0 0.0
    %1355 = vmatprep.subr.mxu0 0.0
    %1356 = vmatpush2.msra.mxu0 0.0
    %1357 = vmatprep.subr.mxu0 0.0
    %1358 = vmatpush2.msra.mxu0 0.0
    %1359 = vmatprep.subr.mxu0 0.0
    %1360 = vmatpush2.msra.mxu0 0.0
    %1361 = vmatprep.subr.mxu0 0.0
    %1362 = vmatpush2.msra.mxu0 0.0
    %1363 = vmatprep.subr.mxu0 0.0
    %1364 = vmatpush2.msra.mxu0 0.0
    %1365 = vmatprep.subr.mxu0 0.0
    %1366 = vmatpush2.msra.mxu0 0.0
    %1367 = vmatprep.subr.mxu0 0.0
    %1368 = vmatpush2.msra.mxu0 0.0
    %1369 = vmatprep.subr.mxu0 0.0
    %1370 = vmatpush2.msra.mxu0 0.0
    %1371 = vmatprep.subr.mxu0 0.0
    %1372 = vmatpush2.msra.mxu0 0.0
    %1373 = vmatprep.subr.mxu0 0.0
    %1374 = vmatpush2.msra.mxu0 0.0
    %1375 = vmatprep.subr.mxu0 0.0
    %1376 = vmatpush2.msra.mxu0 0.0
    %1377 = vmatprep.subr.mxu0 0.0
    %1378 = vmatpush2.msra.mxu0 0.0
    %1379 = vmatprep.mubr.f32.mxu0 0.0
    %1380 = vmatmul.mubr.f32.gmra.mxu0 %v1292
    %v1381 = vpop.f32.mrf.mxu0
    %v1382 = vadd.f32 %v1314, %v1381
    %v1383 = vpop.f32.mrf.mxu0
    %1384 = vdwg.mxu0
    %1385 = vst [vmem:[#allocation10] sm:$0xff] %v1382
    // Predicated region
    $region34: #{tpu_custom_call.1} parent=1 // pred_check
      _
    $region35: #{tpu_custom_call.1} parent=1 // pred_check_branch
      %1387 = sbr.rel (0) target = $region37
    $region36: #{tpu_custom_call.1} parent=1 // pred_region
      %s1389 = ssub.s32 128, 128
      %1390 = vsyncadd [#allocation4], %s1389
      %s1392 = sshll.u32 [#allocation10], 4
      %s1393 = int_to_ptr.vmem [resolvable:$true] %s1392
      %1395 = dma.vmem_to_hbm [thread:$0]  %s1393, 128, %s4, [#allocation4]
    $region37: #{tpu_custom_call.1} parent=1 // pred_fallthru
      _
    // Predicated region
    $region38: #{tpu_custom_call.1} parent=1 // pred_check
      _
    $region39: #{tpu_custom_call.1} parent=1 // pred_check_branch
      %1397 = sbr.rel (0) target = $region41
    $region40: #{tpu_custom_call.1} parent=1 // pred_region
      %1398 = dma.done [#allocation4], 128
    $region41: #{tpu_custom_call.1} parent=1 // pred_fallthru
      _
    %1399 = vsyncpa [#allocation3], 1
    %1400 = vsyncpa [#allocation6], 1
    %1401 = vsyncpa [#allocation9], 1
    %1402 = vsyncpa [#allocation4], 1

</llo_original>
